<compile_context>
chip_gen: v5e
topology: v5e:2x2
jax: 0.10.0
libtpu: 0.0.40
codegen_flags: <defaults>
</compile_context>

<pallas_src>
import functools

import jax
import jax.numpy as jnp
from jax.experimental import pallas as pl
from jax.experimental.pallas import tpu as pltpu

LANE = 128
SUBLANE = 8
NCORES = 2                          # megacore split (v7x); clamped for small inputs
TARGET_BLOCK_BYTES = 4 * 1024 * 1024   # per input per pipeline buffer
VMEM_LIMIT_BYTES = 40 * 1024 * 1024    # 2 inputs x 2 buffers x 4 MiB + headroom
MIN_PALLAS_ELEMS = 128 * 1024          # below this, plain XLA beats launch overhead


def _mse_partial_kernel(x_ref, y_ref, o_ref, acc_ref, *,
                        valid_rows, block_rows, steps, num_blocks):
    """Per-core partial sums of (x - y)^2 into an (8, 128) output tile."""
    c = pl.program_id(0)
    i = pl.program_id(1)
    blk = c * steps + i               # logical block index (may be >= num_blocks)

    @pl.when(i == 0)
    def _():
        acc_ref[...] = jnp.zeros_like(acc_ref)

    d = x_ref[...].astype(jnp.float32) - y_ref[...].astype(jnp.float32)
    dd = d * d

    # Hot path: every in-range block except the last is fully valid -> no mask,
    # just a tile-aligned fold into the tiny resident accumulator.
    @pl.when(blk < num_blocks - 1)
    def _():
        acc_ref[...] += jnp.sum(dd.reshape(-1, SUBLANE, LANE), axis=0)

    # Cold path: last real block (may overhang the array -> garbage rows) and
    # clamped duplicate blocks (blk >= num_blocks, re-read of the last block by
    # the second core slice) -> row mask; clamped blocks contribute nothing.
    @pl.when(blk >= num_blocks - 1)
    def _():
        row0 = jnp.minimum(blk, num_blocks - 1) * block_rows
        row_idx = row0 + jax.lax.broadcasted_iota(jnp.int32, dd.shape, 0)
        lim = jnp.where(blk == num_blocks - 1, valid_rows, -1)
        masked = jnp.where(row_idx < lim, dd, 0.0)
        acc_ref[...] += jnp.sum(masked.reshape(-1, SUBLANE, LANE), axis=0)

    @pl.when(i == pl.num_programs(1) - 1)
    def _():
        o_ref[...] = acc_ref[...]


@functools.partial(jax.jit, static_argnames=("rows", "block_rows"))
def _mse_partial_pallas(x2d, y2d, *, rows, block_rows):
    num_blocks = pl.cdiv(rows, block_rows)
    cores = min(NCORES, num_blocks)          # don't duplicate DMA for tiny inputs
    steps = pl.cdiv(num_blocks, cores)

    def in_map(c, i):
        # Clamp block indices that fall past the array (their contribution is
        # masked to zero in the kernel) so every DMA stays in bounds.
        return (jnp.minimum(c * steps + i, num_blocks - 1), 0)

    kernel = functools.partial(_mse_partial_kernel, valid_rows=rows,
                               block_rows=block_rows, steps=steps,
                               num_blocks=num_blocks)
    return pl.pallas_call(
        kernel,
        out_shape=jax.ShapeDtypeStruct((cores * SUBLANE, LANE), jnp.float32),
        grid_spec=pltpu.PrefetchScalarGridSpec(
            num_scalar_prefetch=0,
            grid=(cores, steps),
            in_specs=[
                pl.BlockSpec((block_rows, LANE), in_map),
                pl.BlockSpec((block_rows, LANE), in_map),
            ],
            out_specs=pl.BlockSpec((SUBLANE, LANE), lambda c, i: (c, 0)),
            scratch_shapes=[pltpu.VMEM((SUBLANE, LANE), jnp.float32)],
        ),
        compiler_params=pltpu.CompilerParams(
            dimension_semantics=("parallel", "arbitrary"),
            vmem_limit_bytes=VMEM_LIMIT_BYTES),
    )(x2d, y2d)


def _pick_block_rows(rows, itemsize):
    """~TARGET_BLOCK_BYTES per input per buffer, multiple of 8, <= data."""
    br = TARGET_BLOCK_BYTES // (LANE * itemsize)
    br = min(br, pl.cdiv(rows, SUBLANE) * SUBLANE)
    return max(SUBLANE, (br // SUBLANE) * SUBLANE)


def mse_loss_pallas(x, y, *, block_rows=None, min_pallas_elems=MIN_PALLAS_ELEMS):
    """MSE with 'mean' reduction; Pallas streaming reduction for large inputs."""
    assert x.shape == y.shape, (x.shape, y.shape)
    n = x.size
    if n < min_pallas_elems:
        # Launch + pipeline fill of a pallas_call dominates for tiny tensors.
        return jnp.mean((x.astype(jnp.float32) - y.astype(jnp.float32)) ** 2)

    xf = jnp.ravel(x)
    yf = jnp.ravel(y)
    rem = n % LANE
    if rem:
        # Zero-pad to a lane multiple (<128 elems); zeros contribute 0 to the
        # squared-diff sum, and we divide by the true n below.
        # TODO(synk): this still copies the operands once for ragged sizes; a
        # flat-index in-kernel tail mask on the unreshaped input would avoid it.
        pad = LANE - rem
        xf = jnp.pad(xf, (0, pad))
        yf = jnp.pad(yf, (0, pad))
    rows = xf.size // LANE
    x2d = xf.reshape(rows, LANE)
    y2d = yf.reshape(rows, LANE)

    if block_rows is None:
        itemsize = max(x2d.dtype.itemsize, y2d.dtype.itemsize)
        block_rows = _pick_block_rows(rows, itemsize)
    else:
        block_rows = max(SUBLANE, (int(block_rows) // SUBLANE) * SUBLANE)

    partials = _mse_partial_pallas(x2d, y2d, rows=rows, block_rows=block_rows)
    return jnp.sum(partials) / jnp.float32(n)


class MultipleMSELoss:
    """JAX/Pallas port of slowfast MultipleMSELoss (reduction='mean')."""

    def __init__(self, reduction="mean"):
        if reduction != "mean":
            # TODO(synk): reduction='none' would return unreduced per-element
            # tensors; only the default 'mean' path is implemented here.
            raise NotImplementedError("only reduction='mean' supported")
        self.reduction = reduction

    def __call__(self, x, y):
        # TODO(synk): pairs large enough for the kernel each get their own
        # pallas_call; a fully fused multi-pair kernel (scalar-prefetched
        # per-pair row offsets) would remove the remaining per-call overhead.
        loss_sum = jnp.float32(0.0)
        multi_loss = []
        for xt, yt in zip(x, y):
            if isinstance(yt, tuple):
                if len(yt) == 2:
                    yt, wt = yt
                    lt = "mse"
                elif len(yt) == 3:
                    yt, wt, lt = yt
                else:
                    raise NotImplementedError
            else:
                wt, lt = 1.0, "mse"
            if lt == "mse":
                loss = mse_loss_pallas(xt, yt)
            else:
                raise NotImplementedError
            loss_sum = loss_sum + loss * wt
            multi_loss.append(loss)
        return loss_sum, multi_loss


if __name__ == "__main__":
    key = jax.random.PRNGKey(0)
    keys = jax.random.split(key, 8)

    # Pair 0: large enough (1 MiB f32) to take the Pallas streaming path.
    x1 = jax.random.normal(keys[0], (2, 16, 128, 64), dtype=jnp.float32)
    y1 = jax.random.normal(keys[1], (2, 16, 128, 64), dtype=jnp.float32)
    # Pair 1: small NCHW-like pair with a weight of 0.5 (plain-XLA fallback).
    x2 = jax.random.normal(keys[2], (2, 4, 16, 16), dtype=jnp.float32)
    y2 = jax.random.normal(keys[3], (2, 4, 16, 16), dtype=jnp.float32)
    # Pair 2: small sequence-like pair (plain-XLA fallback).
    x3 = jax.random.normal(keys[4], (2, 8, 32), dtype=jnp.float32)
    y3 = jax.random.normal(keys[5], (2, 8, 32), dtype=jnp.float32)

    preds = [x1, x2, x3]
    targets = [y1, (y2, 0.5), y3]

    loss_fn = MultipleMSELoss(reduction="mean")
    loss_sum, multi_loss = loss_fn(preds, targets)
    loss_sum = jax.block_until_ready(loss_sum)
    multi_loss = [jax.block_until_ready(l) for l in multi_loss]

    # Reference check against plain JAX.
    refs = [jnp.mean((a - b) ** 2) for a, b in ((x1, y1), (x2, y2), (x3, y3))]
    ref_sum = refs[0] + 0.5 * refs[1] + refs[2]
    for got, want in zip(multi_loss, refs):
        assert jnp.allclose(got, want, rtol=1e-5, atol=1e-6), (got, want)
    assert jnp.allclose(loss_sum, ref_sum, rtol=1e-5, atol=1e-6), (loss_sum, ref_sum)

    # Extra coverage: force the kernel onto a ragged shape with tiny blocks so
    # the multi-block, two-core-slice, clamped-block and tail-mask paths run.
    xr = jax.random.normal(keys[6], (2, 3, 17, 23), dtype=jnp.float32)
    yr = jax.random.normal(keys[7], (2, 3, 17, 23), dtype=jnp.float32)
    got = jax.block_until_ready(
        mse_loss_pallas(xr, yr, block_rows=8, min_pallas_elems=0))
    want = jnp.mean((xr - yr) ** 2)
    assert jnp.allclose(got, want, rtol=1e-5, atol=1e-6), (got, want)

    print("KERNEL_OK")
</pallas_src>

<mosaic_0001>
module attributes {stable_mosaic.version = 11 : i64} {
  func.func @_mse_partial_kernel(%arg0: i32, %arg1: i32, %arg2: memref<2048x128xf32, #tpu.memory_space<vmem>>, %arg3: memref<2048x128xf32, #tpu.memory_space<vmem>>, %arg4: memref<8x128xf32, #tpu.memory_space<vmem>>, %arg5: memref<8x128xf32, #tpu.memory_space<vmem>>) attributes {dimension_semantics = [#tpu.dimension_semantics<parallel>, #tpu.dimension_semantics<arbitrary>], iteration_bounds = array<i64: 1, 1>, scalar_prefetch = 0 : i64, scratch_operands = 1 : i64, tpu.core_type = #tpu.core_type<tc>, window_params = [{transform_indices = @transform_0, window_bounds = array<i64: 2048, 128>}, {transform_indices = @transform_1, window_bounds = array<i64: 2048, 128>}, {transform_indices = @transform_2, window_bounds = array<i64: 8, 128>}]} {
    %c1_i32 = arith.constant 1 : i32
    %0 = arith.muli %arg0, %c1_i32 : i32
    %1 = arith.addi %0, %arg1 : i32
    %c0_i32 = arith.constant 0 : i32
    %2 = arith.cmpi eq, %arg1, %c0_i32 : i32
    %3 = arith.extui %2 : i1 to i32
    %c0_i32_0 = arith.constant 0 : i32
    %4 = arith.cmpi ne, %3, %c0_i32_0 : i32
    scf.if %4 {
      %cst = arith.constant 0.000000e+00 : f32
      %18 = vector.broadcast %cst : f32 to vector<8x128xf32>
      %c0_10 = arith.constant 0 : index
      %c0_11 = arith.constant 0 : index
      %19 = vector.load %arg5[%c0_10, %c0_11] : memref<8x128xf32, #tpu.memory_space<vmem>>, vector<8x128xf32>
      tpu.vector_store %arg5[%c0_10, %c0_11], %18 {strides = array<i32>} : memref<8x128xf32, #tpu.memory_space<vmem>>, vector<8x128xf32>,
    } else {
    }
    %c0 = arith.constant 0 : index
    %c0_1 = arith.constant 0 : index
    %5 = vector.load %arg2[%c0, %c0_1] : memref<2048x128xf32, #tpu.memory_space<vmem>>, vector<2048x128xf32>
    %c0_2 = arith.constant 0 : index
    %c0_3 = arith.constant 0 : index
    %6 = vector.load %arg3[%c0_2, %c0_3] : memref<2048x128xf32, #tpu.memory_space<vmem>>, vector<2048x128xf32>
    %7 = arith.subf %5, %6 : vector<2048x128xf32>
    %8 = arith.mulf %7, %7 : vector<2048x128xf32>
    %c0_i32_4 = arith.constant 0 : i32
    %9 = arith.cmpi slt, %1, %c0_i32_4 : i32
    %10 = arith.extui %9 : i1 to i32
    %c0_i32_5 = arith.constant 0 : i32
    %11 = arith.cmpi ne, %10, %c0_i32_5 : i32
    scf.if %11 {
      %c0_10 = arith.constant 0 : index
      %c0_11 = arith.constant 0 : index
      %18 = vector.load %arg5[%c0_10, %c0_11] : memref<8x128xf32, #tpu.memory_space<vmem>>, vector<8x128xf32>
      %19 = vector.shape_cast %8 : vector<2048x128xf32> to vector<256x8x128xf32>
      %cst = arith.constant dense<0.000000e+00> : vector<8x128xf32>
      %20 = vector.multi_reduction <add>, %19, %cst [0] : vector<256x8x128xf32> to vector<8x128xf32>
      %21 = arith.addf %18, %20 : vector<8x128xf32>
      %c0_12 = arith.constant 0 : index
      %c0_13 = arith.constant 0 : index
      %22 = vector.load %arg5[%c0_12, %c0_13] : memref<8x128xf32, #tpu.memory_space<vmem>>, vector<8x128xf32>
      tpu.vector_store %arg5[%c0_12, %c0_13], %21 {strides = array<i32>} : memref<8x128xf32, #tpu.memory_space<vmem>>, vector<8x128xf32>,
    } else {
    }
    %c0_i32_6 = arith.constant 0 : i32
    %12 = arith.cmpi sge, %1, %c0_i32_6 : i32
    %13 = arith.extui %12 : i1 to i32
    %c0_i32_7 = arith.constant 0 : i32
    %14 = arith.cmpi ne, %13, %c0_i32_7 : i32
    scf.if %14 {
      %c0_i32_10 = arith.constant 0 : i32
      %18 = arith.minsi %1, %c0_i32_10 : i32
      %c2048_i32 = arith.constant 2048 : i32
      %19 = arith.muli %18, %c2048_i32 : i32
      %20 = tpu.iota {dimensions = array<i32: 0>} : vector<2048x128xi32>
      %21 = vector.broadcast %19 : i32 to vector<2048x128xi32>
      %22 = arith.addi %21, %20 : vector<2048x128xi32>
      %c0_i32_11 = arith.constant 0 : i32
      %23 = arith.cmpi eq, %1, %c0_i32_11 : i32
      %c2048_i32_12 = arith.constant 2048 : i32
      %c-1_i32 = arith.constant -1 : i32
      %24 = arith.select %23, %c2048_i32_12, %c-1_i32 : i32
      %25 = vector.broadcast %24 : i32 to vector<2048x128xi32>
      %26 = arith.cmpi slt, %22, %25 : vector<2048x128xi32>
      %cst = arith.constant 0.000000e+00 : f32
      %27 = vector.broadcast %cst : f32 to vector<2048x128xf32>
      %28 = arith.select %26, %8, %27 : vector<2048x128xi1>, vector<2048x128xf32>
      %c0_13 = arith.constant 0 : index
      %c0_14 = arith.constant 0 : index
      %29 = vector.load %arg5[%c0_13, %c0_14] : memref<8x128xf32, #tpu.memory_space<vmem>>, vector<8x128xf32>
      %30 = vector.shape_cast %28 : vector<2048x128xf32> to vector<256x8x128xf32>
      %cst_15 = arith.constant dense<0.000000e+00> : vector<8x128xf32>
      %31 = vector.multi_reduction <add>, %30, %cst_15 [0] : vector<256x8x128xf32> to vector<8x128xf32>
      %32 = arith.addf %29, %31 : vector<8x128xf32>
      %c0_16 = arith.constant 0 : index
      %c0_17 = arith.constant 0 : index
      %33 = vector.load %arg5[%c0_16, %c0_17] : memref<8x128xf32, #tpu.memory_space<vmem>>, vector<8x128xf32>
      tpu.vector_store %arg5[%c0_16, %c0_17], %32 {strides = array<i32>} : memref<8x128xf32, #tpu.memory_space<vmem>>, vector<8x128xf32>,
    } else {
    }
    %c0_i32_8 = arith.constant 0 : i32
    %15 = arith.cmpi eq, %arg1, %c0_i32_8 : i32
    %16 = arith.extui %15 : i1 to i32
    %c0_i32_9 = arith.constant 0 : i32
    %17 = arith.cmpi ne, %16, %c0_i32_9 : i32
    scf.if %17 {
      %c0_10 = arith.constant 0 : index
      %c0_11 = arith.constant 0 : index
      %18 = vector.load %arg5[%c0_10, %c0_11] : memref<8x128xf32, #tpu.memory_space<vmem>>, vector<8x128xf32>
      %c0_12 = arith.constant 0 : index
      %c0_13 = arith.constant 0 : index
      %19 = vector.load %arg4[%c0_12, %c0_13] : memref<8x128xf32, #tpu.memory_space<vmem>>, vector<8x128xf32>
      tpu.vector_store %arg4[%c0_12, %c0_13], %18 {strides = array<i32>} : memref<8x128xf32, #tpu.memory_space<vmem>>, vector<8x128xf32>,
    } else {
    }
    return
  }
  func.func @transform_0(%arg0: i32, %arg1: i32) -> (i32, i32) {
    %c1_i32 = arith.constant 1 : i32
    %0 = arith.muli %arg0, %c1_i32 : i32
    %1 = arith.addi %0, %arg1 : i32
    %c0_i32 = arith.constant 0 : i32
    %2 = arith.minsi %1, %c0_i32 : i32
    %c0_i32_0 = arith.constant 0 : i32
    %c0_i32_1 = arith.constant 0 : i32
    return %2, %c0_i32_0 : i32, i32
  }
  func.func @transform_1(%arg0: i32, %arg1: i32) -> (i32, i32) {
    %c1_i32 = arith.constant 1 : i32
    %0 = arith.muli %arg0, %c1_i32 : i32
    %1 = arith.addi %0, %arg1 : i32
    %c0_i32 = arith.constant 0 : i32
    %2 = arith.minsi %1, %c0_i32 : i32
    %c0_i32_0 = arith.constant 0 : i32
    %c0_i32_1 = arith.constant 0 : i32
    return %2, %c0_i32_0 : i32, i32
  }
  func.func @transform_2(%arg0: i32, %arg1: i32) -> (i32, i32) {
    %c0_i32 = arith.constant 0 : i32
    %c0_i32_0 = arith.constant 0 : i32
    return %arg0, %c0_i32 : i32, i32
  }
}

</mosaic_0001>

<llo_original>
// kernel: _mse_partial_pallas.1
$region0: #{_mse_partial_pallas.1}
  #allocation0 [shape = 'u32[]', space=smem, size = 0x4, offset = 0x4, fixed_abs, tag = 'smem constant byte address 0x4 - core index']
  #allocation1 [shape = 'u32[72,128]{1,0:T(1,128)}', space=vmem, size = 0x9000, scoped, tag = 'internal scratch']
  #allocation2 [shape = 'f32[8,128]{1,0:T(8,128)}', space=vmem, size = 0x1000, scoped, tag = 'scratch operand']
  %s0 = inlined_call_operand.hbm [shape: f32[2048,128], index: 0, kind: input, shape index: {}]
  %s1 = inlined_call_operand.hbm [shape: f32[2048,128], index: 1, kind: input, shape index: {}]
  %s2 = inlined_call_operand.hbm [shape: f32[8,128], index: 2, kind: output, shape index: {}]
  %s3 = sld [smem:[#allocation0]]
  $region42: #{_mse_partial_pallas.1} parent=0
    _
  %s5 = ssub.s32 1, %s3
  %s6 = scalar_select 0, %s5, %s3
  $region1: #{_mse_partial_pallas.1} parent=0
    #allocation3 [shape = 'u8[1048576]{0}', space=vmem, size = 0x100000, scoped, tag = 'input window, operand 0, single buffered']
    #allocation4 [shape = 's32[1]{0}', space=sflag, size = 0x4, scoped, tag = 'scoped memory for _mse_partial_pallas.1']
    #allocation5 [shape = 's32[1]{0}', space=sflag, size = 0x4, scoped, tag = 'scoped memory for _mse_partial_pallas.1']
    #allocation6 [shape = 'u8[1048576]{0}', space=vmem, size = 0x100000, scoped, tag = 'input window, operand 1, single buffered']
    #allocation7 [shape = 's32[1]{0}', space=sflag, size = 0x4, scoped, tag = 'scoped memory for _mse_partial_pallas.1']
    #allocation8 [shape = 'u8[4096]{0}', space=vmem, size = 0x1000, scoped, tag = 'output window, operand 0, single buffered']
    %7 = vsyncpa [#allocation4], 0
    %8 = vsyncpa [#allocation7], 0
    %9 = vsyncpa [#allocation5], 0
    // Predicated region
    $region2: #{_mse_partial_pallas.1} parent=1 // pred_check
      _
    $region3: #{_mse_partial_pallas.1} parent=1 // pred_check_branch
      %11 = sbr.rel (0) target = $region5
    $region4: #{_mse_partial_pallas.1} parent=1 // pred_region
      %s12 = sadd.s32 0, 0
      %p13 = scmp.lt.s32.totalorder %s12, 0
      %s14 = scalar_select %p13, %s12, 0
      %s15 = smul.u32 256, %s14
      %17 = vsyncadd [#allocation4], 0
      %s18 = smul.addr %s15, 8
      %s19 = scalar_lea.hbm %s0, %s18
      %s20 = sshll.u32 %s19, 4
      %s21 = int_to_ptr.hbm [resolvable:$true] %s20
      %s22 = sshll.u32 [#allocation3], 4
      %s23 = int_to_ptr.vmem [resolvable:$true] %s22
      %28 = dma.hbm_to_vmem [thread:$0]  %s21, 32768, %s23, [#allocation4], 128, 128, 8
    $region5: #{_mse_partial_pallas.1} parent=1 // pred_fallthru
      _
    // Predicated region
    $region6: #{_mse_partial_pallas.1} parent=1 // pred_check
      _
    $region7: #{_mse_partial_pallas.1} parent=1 // pred_check_branch
      %30 = sbr.rel (0) target = $region9
    $region8: #{_mse_partial_pallas.1} parent=1 // pred_region
      %s31 = sadd.s32 0, 0
      %p32 = scmp.lt.s32.totalorder %s31, 0
      %s33 = scalar_select %p32, %s31, 0
      %s34 = smul.u32 256, %s33
      %36 = vsyncadd [#allocation7], 0
      %s37 = smul.addr %s34, 8
      %s38 = scalar_lea.hbm %s1, %s37
      %s39 = sshll.u32 %s38, 4
      %s40 = int_to_ptr.hbm [resolvable:$true] %s39
      %s41 = sshll.u32 [#allocation6], 4
      %s42 = int_to_ptr.vmem [resolvable:$true] %s41
      %47 = dma.hbm_to_vmem [thread:$0]  %s40, 32768, %s42, [#allocation7], 128, 128, 8
    $region9: #{_mse_partial_pallas.1} parent=1 // pred_fallthru
      _
    // Predicated region
    $region10: #{_mse_partial_pallas.1} parent=1 // pred_check
      _
    $region11: #{_mse_partial_pallas.1} parent=1 // pred_check_branch
      %49 = sbr.rel (0) target = $region13
    $region12: #{_mse_partial_pallas.1} parent=1 // pred_region
      %51 = dma.done [#allocation4], 32768
    $region13: #{_mse_partial_pallas.1} parent=1 // pred_fallthru
      _
    // Predicated region
    $region14: #{_mse_partial_pallas.1} parent=1 // pred_check
      _
    $region15: #{_mse_partial_pallas.1} parent=1 // pred_check_branch
      %53 = sbr.rel (0) target = $region17
    $region16: #{_mse_partial_pallas.1} parent=1 // pred_region
      %55 = dma.done [#allocation7], 32768
    $region17: #{_mse_partial_pallas.1} parent=1 // pred_fallthru
      _
    %s56 = sadd.s32 0, 0
    %p57 = scmp.lt.s32.totalorder %s56, 0
    %s58 = scalar_select %p57, %s56, 0
    %s59 = smul.u32 256, %s58
    %s60 = sadd.s32 0, 0
    %p61 = scmp.lt.s32.totalorder %s60, 0
    %s62 = scalar_select %p61, %s60, 0
    %s63 = smul.u32 256, %s62
    %s64 = sadd.s32 0, 0
    %p65 = scmp.eq.s32.totalorder 0, 0
    // Predicated region
    $region18: #{_mse_partial_pallas.1} parent=1 // pred_check
      %p66 = pneg %p65
    $region19: #{_mse_partial_pallas.1} parent=1 // pred_check_branch
      %68 = sbr.rel (%p66) target = $region21
    $region20: #{_mse_partial_pallas.1} parent=1 // pred_region
      %69 = vst [vmem:[#allocation2] sm:$0xff] 0.0
    $region21: #{_mse_partial_pallas.1} parent=1 // pred_fallthru
      _
    %v70 = vld [vmem:[#allocation3] sm:$0xff]
    %v71 = vld [vmem:[#allocation3 + $0x8] sm:$0xff]
    %v72 = vld [vmem:[#allocation3 + $0x10] sm:$0xff]
    %v73 = vld [vmem:[#allocation3 + $0x18] sm:$0xff]
    %v74 = vld [vmem:[#allocation3 + $0x20] sm:$0xff]
    %v75 = vld [vmem:[#allocation3 + $0x28] sm:$0xff]
    %v76 = vld [vmem:[#allocation3 + $0x30] sm:$0xff]
    %v77 = vld [vmem:[#allocation3 + $0x38] sm:$0xff]
    %v78 = vld [vmem:[#allocation3 + $0x40] sm:$0xff]
    %v79 = vld [vmem:[#allocation3 + $0x48] sm:$0xff]
    %v80 = vld [vmem:[#allocation3 + $0x50] sm:$0xff]
    %v81 = vld [vmem:[#allocation3 + $0x58] sm:$0xff]
    %v82 = vld [vmem:[#allocation3 + $0x60] sm:$0xff]
    %v83 = vld [vmem:[#allocation3 + $0x68] sm:$0xff]
    %v84 = vld [vmem:[#allocation3 + $0x70] sm:$0xff]
    %v85 = vld [vmem:[#allocation3 + $0x78] sm:$0xff]
    %v86 = vld [vmem:[#allocation3 + $0x80] sm:$0xff]
    %v87 = vld [vmem:[#allocation3 + $0x88] sm:$0xff]
    %v88 = vld [vmem:[#allocation3 + $0x90] sm:$0xff]
    %v89 = vld [vmem:[#allocation3 + $0x98] sm:$0xff]
    %v90 = vld [vmem:[#allocation3 + $0xa0] sm:$0xff]
    %v91 = vld [vmem:[#allocation3 + $0xa8] sm:$0xff]
    %v92 = vld [vmem:[#allocation3 + $0xb0] sm:$0xff]
    %v93 = vld [vmem:[#allocation3 + $0xb8] sm:$0xff]
    %v94 = vld [vmem:[#allocation3 + $0xc0] sm:$0xff]
    %v95 = vld [vmem:[#allocation3 + $0xc8] sm:$0xff]
    %v96 = vld [vmem:[#allocation3 + $0xd0] sm:$0xff]
    %v97 = vld [vmem:[#allocation3 + $0xd8] sm:$0xff]
    %v98 = vld [vmem:[#allocation3 + $0xe0] sm:$0xff]
    %v99 = vld [vmem:[#allocation3 + $0xe8] sm:$0xff]
    %v100 = vld [vmem:[#allocation3 + $0xf0] sm:$0xff]
    %v101 = vld [vmem:[#allocation3 + $0xf8] sm:$0xff]
    %v102 = vld [vmem:[#allocation3 + $0x100] sm:$0xff]
    %v103 = vld [vmem:[#allocation3 + $0x108] sm:$0xff]
    %v104 = vld [vmem:[#allocation3 + $0x110] sm:$0xff]
    %v105 = vld [vmem:[#allocation3 + $0x118] sm:$0xff]
    %v106 = vld [vmem:[#allocation3 + $0x120] sm:$0xff]
    %v107 = vld [vmem:[#allocation3 + $0x128] sm:$0xff]
    %v108 = vld [vmem:[#allocation3 + $0x130] sm:$0xff]
    %v109 = vld [vmem:[#allocation3 + $0x138] sm:$0xff]
    %v110 = vld [vmem:[#allocation3 + $0x140] sm:$0xff]
    %v111 = vld [vmem:[#allocation3 + $0x148] sm:$0xff]
    %v112 = vld [vmem:[#allocation3 + $0x150] sm:$0xff]
    %v113 = vld [vmem:[#allocation3 + $0x158] sm:$0xff]
    %v114 = vld [vmem:[#allocation3 + $0x160] sm:$0xff]
    %v115 = vld [vmem:[#allocation3 + $0x168] sm:$0xff]
    %v116 = vld [vmem:[#allocation3 + $0x170] sm:$0xff]
    %v117 = vld [vmem:[#allocation3 + $0x178] sm:$0xff]
    %v118 = vld [vmem:[#allocation3 + $0x180] sm:$0xff]
    %v119 = vld [vmem:[#allocation3 + $0x188] sm:$0xff]
    %v120 = vld [vmem:[#allocation3 + $0x190] sm:$0xff]
    %v121 = vld [vmem:[#allocation3 + $0x198] sm:$0xff]
    %v122 = vld [vmem:[#allocation3 + $0x1a0] sm:$0xff]
    %v123 = vld [vmem:[#allocation3 + $0x1a8] sm:$0xff]
    %v124 = vld [vmem:[#allocation3 + $0x1b0] sm:$0xff]
    %v125 = vld [vmem:[#allocation3 + $0x1b8] sm:$0xff]
    %v126 = vld [vmem:[#allocation3 + $0x1c0] sm:$0xff]
    %v127 = vld [vmem:[#allocation3 + $0x1c8] sm:$0xff]
    %v128 = vld [vmem:[#allocation3 + $0x1d0] sm:$0xff]
    %v129 = vld [vmem:[#allocation3 + $0x1d8] sm:$0xff]
    %v130 = vld [vmem:[#allocation3 + $0x1e0] sm:$0xff]
    %v131 = vld [vmem:[#allocation3 + $0x1e8] sm:$0xff]
    %v132 = vld [vmem:[#allocation3 + $0x1f0] sm:$0xff]
    %v133 = vld [vmem:[#allocation3 + $0x1f8] sm:$0xff]
    %v134 = vld [vmem:[#allocation3 + $0x200] sm:$0xff]
    %v135 = vld [vmem:[#allocation3 + $0x208] sm:$0xff]
    %v136 = vld [vmem:[#allocation3 + $0x210] sm:$0xff]
    %v137 = vld [vmem:[#allocation3 + $0x218] sm:$0xff]
    %v138 = vld [vmem:[#allocation3 + $0x220] sm:$0xff]
    %v139 = vld [vmem:[#allocation3 + $0x228] sm:$0xff]
    %v140 = vld [vmem:[#allocation3 + $0x230] sm:$0xff]
    %v141 = vld [vmem:[#allocation3 + $0x238] sm:$0xff]
    %v142 = vld [vmem:[#allocation3 + $0x240] sm:$0xff]
    %v143 = vld [vmem:[#allocation3 + $0x248] sm:$0xff]
    %v144 = vld [vmem:[#allocation3 + $0x250] sm:$0xff]
    %v145 = vld [vmem:[#allocation3 + $0x258] sm:$0xff]
    %v146 = vld [vmem:[#allocation3 + $0x260] sm:$0xff]
    %v147 = vld [vmem:[#allocation3 + $0x268] sm:$0xff]
    %v148 = vld [vmem:[#allocation3 + $0x270] sm:$0xff]
    %v149 = vld [vmem:[#allocation3 + $0x278] sm:$0xff]
    %v150 = vld [vmem:[#allocation3 + $0x280] sm:$0xff]
    %v151 = vld [vmem:[#allocation3 + $0x288] sm:$0xff]
    %v152 = vld [vmem:[#allocation3 + $0x290] sm:$0xff]
    %v153 = vld [vmem:[#allocation3 + $0x298] sm:$0xff]
    %v154 = vld [vmem:[#allocation3 + $0x2a0] sm:$0xff]
    %v155 = vld [vmem:[#allocation3 + $0x2a8] sm:$0xff]
    %v156 = vld [vmem:[#allocation3 + $0x2b0] sm:$0xff]
    %v157 = vld [vmem:[#allocation3 + $0x2b8] sm:$0xff]
    %v158 = vld [vmem:[#allocation3 + $0x2c0] sm:$0xff]
    %v159 = vld [vmem:[#allocation3 + $0x2c8] sm:$0xff]
    %v160 = vld [vmem:[#allocation3 + $0x2d0] sm:$0xff]
    %v161 = vld [vmem:[#allocation3 + $0x2d8] sm:$0xff]
    %v162 = vld [vmem:[#allocation3 + $0x2e0] sm:$0xff]
    %v163 = vld [vmem:[#allocation3 + $0x2e8] sm:$0xff]
    %v164 = vld [vmem:[#allocation3 + $0x2f0] sm:$0xff]
    %v165 = vld [vmem:[#allocation3 + $0x2f8] sm:$0xff]
    %v166 = vld [vmem:[#allocation3 + $0x300] sm:$0xff]
    %v167 = vld [vmem:[#allocation3 + $0x308] sm:$0xff]
    %v168 = vld [vmem:[#allocation3 + $0x310] sm:$0xff]
    %v169 = vld [vmem:[#allocation3 + $0x318] sm:$0xff]
    %v170 = vld [vmem:[#allocation3 + $0x320] sm:$0xff]
    %v171 = vld [vmem:[#allocation3 + $0x328] sm:$0xff]
    %v172 = vld [vmem:[#allocation3 + $0x330] sm:$0xff]
    %v173 = vld [vmem:[#allocation3 + $0x338] sm:$0xff]
    %v174 = vld [vmem:[#allocation3 + $0x340] sm:$0xff]
    %v175 = vld [vmem:[#allocation3 + $0x348] sm:$0xff]
    %v176 = vld [vmem:[#allocation3 + $0x350] sm:$0xff]
    %v177 = vld [vmem:[#allocation3 + $0x358] sm:$0xff]
    %v178 = vld [vmem:[#allocation3 + $0x360] sm:$0xff]
    %v179 = vld [vmem:[#allocation3 + $0x368] sm:$0xff]
    %v180 = vld [vmem:[#allocation3 + $0x370] sm:$0xff]
    %v181 = vld [vmem:[#allocation3 + $0x378] sm:$0xff]
    %v182 = vld [vmem:[#allocation3 + $0x380] sm:$0xff]
    %v183 = vld [vmem:[#allocation3 + $0x388] sm:$0xff]
    %v184 = vld [vmem:[#allocation3 + $0x390] sm:$0xff]
    %v185 = vld [vmem:[#allocation3 + $0x398] sm:$0xff]
    %v186 = vld [vmem:[#allocation3 + $0x3a0] sm:$0xff]
    %v187 = vld [vmem:[#allocation3 + $0x3a8] sm:$0xff]
    %v188 = vld [vmem:[#allocation3 + $0x3b0] sm:$0xff]
    %v189 = vld [vmem:[#allocation3 + $0x3b8] sm:$0xff]
    %v190 = vld [vmem:[#allocation3 + $0x3c0] sm:$0xff]
    %v191 = vld [vmem:[#allocation3 + $0x3c8] sm:$0xff]
    %v192 = vld [vmem:[#allocation3 + $0x3d0] sm:$0xff]
    %v193 = vld [vmem:[#allocation3 + $0x3d8] sm:$0xff]
    %v194 = vld [vmem:[#allocation3 + $0x3e0] sm:$0xff]
    %v195 = vld [vmem:[#allocation3 + $0x3e8] sm:$0xff]
    %v196 = vld [vmem:[#allocation3 + $0x3f0] sm:$0xff]
    %v197 = vld [vmem:[#allocation3 + $0x3f8] sm:$0xff]
    %v198 = vld [vmem:[#allocation3 + $0x400] sm:$0xff]
    %v199 = vld [vmem:[#allocation3 + $0x408] sm:$0xff]
    %v200 = vld [vmem:[#allocation3 + $0x410] sm:$0xff]
    %v201 = vld [vmem:[#allocation3 + $0x418] sm:$0xff]
    %v202 = vld [vmem:[#allocation3 + $0x420] sm:$0xff]
    %v203 = vld [vmem:[#allocation3 + $0x428] sm:$0xff]
    %v204 = vld [vmem:[#allocation3 + $0x430] sm:$0xff]
    %v205 = vld [vmem:[#allocation3 + $0x438] sm:$0xff]
    %v206 = vld [vmem:[#allocation3 + $0x440] sm:$0xff]
    %v207 = vld [vmem:[#allocation3 + $0x448] sm:$0xff]
    %v208 = vld [vmem:[#allocation3 + $0x450] sm:$0xff]
    %v209 = vld [vmem:[#allocation3 + $0x458] sm:$0xff]
    %v210 = vld [vmem:[#allocation3 + $0x460] sm:$0xff]
    %v211 = vld [vmem:[#allocation3 + $0x468] sm:$0xff]
    %v212 = vld [vmem:[#allocation3 + $0x470] sm:$0xff]
    %v213 = vld [vmem:[#allocation3 + $0x478] sm:$0xff]
    %v214 = vld [vmem:[#allocation3 + $0x480] sm:$0xff]
    %v215 = vld [vmem:[#allocation3 + $0x488] sm:$0xff]
    %v216 = vld [vmem:[#allocation3 + $0x490] sm:$0xff]
    %v217 = vld [vmem:[#allocation3 + $0x498] sm:$0xff]
    %v218 = vld [vmem:[#allocation3 + $0x4a0] sm:$0xff]
    %v219 = vld [vmem:[#allocation3 + $0x4a8] sm:$0xff]
    %v220 = vld [vmem:[#allocation3 + $0x4b0] sm:$0xff]
    %v221 = vld [vmem:[#allocation3 + $0x4b8] sm:$0xff]
    %v222 = vld [vmem:[#allocation3 + $0x4c0] sm:$0xff]
    %v223 = vld [vmem:[#allocation3 + $0x4c8] sm:$0xff]
    %v224 = vld [vmem:[#allocation3 + $0x4d0] sm:$0xff]
    %v225 = vld [vmem:[#allocation3 + $0x4d8] sm:$0xff]
    %v226 = vld [vmem:[#allocation3 + $0x4e0] sm:$0xff]
    %v227 = vld [vmem:[#allocation3 + $0x4e8] sm:$0xff]
    %v228 = vld [vmem:[#allocation3 + $0x4f0] sm:$0xff]
    %v229 = vld [vmem:[#allocation3 + $0x4f8] sm:$0xff]
    %v230 = vld [vmem:[#allocation3 + $0x500] sm:$0xff]
    %v231 = vld [vmem:[#allocation3 + $0x508] sm:$0xff]
    %v232 = vld [vmem:[#allocation3 + $0x510] sm:$0xff]
    %v233 = vld [vmem:[#allocation3 + $0x518] sm:$0xff]
    %v234 = vld [vmem:[#allocation3 + $0x520] sm:$0xff]
    %v235 = vld [vmem:[#allocation3 + $0x528] sm:$0xff]
    %v236 = vld [vmem:[#allocation3 + $0x530] sm:$0xff]
    %v237 = vld [vmem:[#allocation3 + $0x538] sm:$0xff]
    %v238 = vld [vmem:[#allocation3 + $0x540] sm:$0xff]
    %v239 = vld [vmem:[#allocation3 + $0x548] sm:$0xff]
    %v240 = vld [vmem:[#allocation3 + $0x550] sm:$0xff]
    %v241 = vld [vmem:[#allocation3 + $0x558] sm:$0xff]
    %v242 = vld [vmem:[#allocation3 + $0x560] sm:$0xff]
    %v243 = vld [vmem:[#allocation3 + $0x568] sm:$0xff]
    %v244 = vld [vmem:[#allocation3 + $0x570] sm:$0xff]
    %v245 = vld [vmem:[#allocation3 + $0x578] sm:$0xff]
    %v246 = vld [vmem:[#allocation3 + $0x580] sm:$0xff]
    %v247 = vld [vmem:[#allocation3 + $0x588] sm:$0xff]
    %v248 = vld [vmem:[#allocation3 + $0x590] sm:$0xff]
    %v249 = vld [vmem:[#allocation3 + $0x598] sm:$0xff]
    %v250 = vld [vmem:[#allocation3 + $0x5a0] sm:$0xff]
    %v251 = vld [vmem:[#allocation3 + $0x5a8] sm:$0xff]
    %v252 = vld [vmem:[#allocation3 + $0x5b0] sm:$0xff]
    %v253 = vld [vmem:[#allocation3 + $0x5b8] sm:$0xff]
    %v254 = vld [vmem:[#allocation3 + $0x5c0] sm:$0xff]
    %v255 = vld [vmem:[#allocation3 + $0x5c8] sm:$0xff]
    %v256 = vld [vmem:[#allocation3 + $0x5d0] sm:$0xff]
    %v257 = vld [vmem:[#allocation3 + $0x5d8] sm:$0xff]
    %v258 = vld [vmem:[#allocation3 + $0x5e0] sm:$0xff]
    %v259 = vld [vmem:[#allocation3 + $0x5e8] sm:$0xff]
    %v260 = vld [vmem:[#allocation3 + $0x5f0] sm:$0xff]
    %v261 = vld [vmem:[#allocation3 + $0x5f8] sm:$0xff]
    %v262 = vld [vmem:[#allocation3 + $0x600] sm:$0xff]
    %v263 = vld [vmem:[#allocation3 + $0x608] sm:$0xff]
    %v264 = vld [vmem:[#allocation3 + $0x610] sm:$0xff]
    %v265 = vld [vmem:[#allocation3 + $0x618] sm:$0xff]
    %v266 = vld [vmem:[#allocation3 + $0x620] sm:$0xff]
    %v267 = vld [vmem:[#allocation3 + $0x628] sm:$0xff]
    %v268 = vld [vmem:[#allocation3 + $0x630] sm:$0xff]
    %v269 = vld [vmem:[#allocation3 + $0x638] sm:$0xff]
    %v270 = vld [vmem:[#allocation3 + $0x640] sm:$0xff]
    %v271 = vld [vmem:[#allocation3 + $0x648] sm:$0xff]
    %v272 = vld [vmem:[#allocation3 + $0x650] sm:$0xff]
    %v273 = vld [vmem:[#allocation3 + $0x658] sm:$0xff]
    %v274 = vld [vmem:[#allocation3 + $0x660] sm:$0xff]
    %v275 = vld [vmem:[#allocation3 + $0x668] sm:$0xff]
    %v276 = vld [vmem:[#allocation3 + $0x670] sm:$0xff]
    %v277 = vld [vmem:[#allocation3 + $0x678] sm:$0xff]
    %v278 = vld [vmem:[#allocation3 + $0x680] sm:$0xff]
    %v279 = vld [vmem:[#allocation3 + $0x688] sm:$0xff]
    %v280 = vld [vmem:[#allocation3 + $0x690] sm:$0xff]
    %v281 = vld [vmem:[#allocation3 + $0x698] sm:$0xff]
    %v282 = vld [vmem:[#allocation3 + $0x6a0] sm:$0xff]
    %v283 = vld [vmem:[#allocation3 + $0x6a8] sm:$0xff]
    %v284 = vld [vmem:[#allocation3 + $0x6b0] sm:$0xff]
    %v285 = vld [vmem:[#allocation3 + $0x6b8] sm:$0xff]
    %v286 = vld [vmem:[#allocation3 + $0x6c0] sm:$0xff]
    %v287 = vld [vmem:[#allocation3 + $0x6c8] sm:$0xff]
    %v288 = vld [vmem:[#allocation3 + $0x6d0] sm:$0xff]
    %v289 = vld [vmem:[#allocation3 + $0x6d8] sm:$0xff]
    %v290 = vld [vmem:[#allocation3 + $0x6e0] sm:$0xff]
    %v291 = vld [vmem:[#allocation3 + $0x6e8] sm:$0xff]
    %v292 = vld [vmem:[#allocation3 + $0x6f0] sm:$0xff]
    %v293 = vld [vmem:[#allocation3 + $0x6f8] sm:$0xff]
    %v294 = vld [vmem:[#allocation3 + $0x700] sm:$0xff]
    %v295 = vld [vmem:[#allocation3 + $0x708] sm:$0xff]
    %v296 = vld [vmem:[#allocation3 + $0x710] sm:$0xff]
    %v297 = vld [vmem:[#allocation3 + $0x718] sm:$0xff]
    %v298 = vld [vmem:[#allocation3 + $0x720] sm:$0xff]
    %v299 = vld [vmem:[#allocation3 + $0x728] sm:$0xff]
    %v300 = vld [vmem:[#allocation3 + $0x730] sm:$0xff]
    %v301 = vld [vmem:[#allocation3 + $0x738] sm:$0xff]
    %v302 = vld [vmem:[#allocation3 + $0x740] sm:$0xff]
    %v303 = vld [vmem:[#allocation3 + $0x748] sm:$0xff]
    %v304 = vld [vmem:[#allocation3 + $0x750] sm:$0xff]
    %v305 = vld [vmem:[#allocation3 + $0x758] sm:$0xff]
    %v306 = vld [vmem:[#allocation3 + $0x760] sm:$0xff]
    %v307 = vld [vmem:[#allocation3 + $0x768] sm:$0xff]
    %v308 = vld [vmem:[#allocation3 + $0x770] sm:$0xff]
    %v309 = vld [vmem:[#allocation3 + $0x778] sm:$0xff]
    %v310 = vld [vmem:[#allocation3 + $0x780] sm:$0xff]
    %v311 = vld [vmem:[#allocation3 + $0x788] sm:$0xff]
    %v312 = vld [vmem:[#allocation3 + $0x790] sm:$0xff]
    %v313 = vld [vmem:[#allocation3 + $0x798] sm:$0xff]
    %v314 = vld [vmem:[#allocation3 + $0x7a0] sm:$0xff]
    %v315 = vld [vmem:[#allocation3 + $0x7a8] sm:$0xff]
    %v316 = vld [vmem:[#allocation3 + $0x7b0] sm:$0xff]
    %v317 = vld [vmem:[#allocation3 + $0x7b8] sm:$0xff]
    %v318 = vld [vmem:[#allocation3 + $0x7c0] sm:$0xff]
    %v319 = vld [vmem:[#allocation3 + $0x7c8] sm:$0xff]
    %v320 = vld [vmem:[#allocation3 + $0x7d0] sm:$0xff]
    %v321 = vld [vmem:[#allocation3 + $0x7d8] sm:$0xff]
    %v322 = vld [vmem:[#allocation3 + $0x7e0] sm:$0xff]
    %v323 = vld [vmem:[#allocation3 + $0x7e8] sm:$0xff]
    %v324 = vld [vmem:[#allocation3 + $0x7f0] sm:$0xff]
    %v325 = vld [vmem:[#allocation3 + $0x7f8] sm:$0xff]
    %v326 = vld [vmem:[#allocation6] sm:$0xff]
    %v327 = vld [vmem:[#allocation6 + $0x8] sm:$0xff]
    %v328 = vld [vmem:[#allocation6 + $0x10] sm:$0xff]
    %v329 = vld [vmem:[#allocation6 + $0x18] sm:$0xff]
    %v330 = vld [vmem:[#allocation6 + $0x20] sm:$0xff]
    %v331 = vld [vmem:[#allocation6 + $0x28] sm:$0xff]
    %v332 = vld [vmem:[#allocation6 + $0x30] sm:$0xff]
    %v333 = vld [vmem:[#allocation6 + $0x38] sm:$0xff]
    %v334 = vld [vmem:[#allocation6 + $0x40] sm:$0xff]
    %v335 = vld [vmem:[#allocation6 + $0x48] sm:$0xff]
    %v336 = vld [vmem:[#allocation6 + $0x50] sm:$0xff]
    %v337 = vld [vmem:[#allocation6 + $0x58] sm:$0xff]
    %v338 = vld [vmem:[#allocation6 + $0x60] sm:$0xff]
    %v339 = vld [vmem:[#allocation6 + $0x68] sm:$0xff]
    %v340 = vld [vmem:[#allocation6 + $0x70] sm:$0xff]
    %v341 = vld [vmem:[#allocation6 + $0x78] sm:$0xff]
    %v342 = vld [vmem:[#allocation6 + $0x80] sm:$0xff]
    %v343 = vld [vmem:[#allocation6 + $0x88] sm:$0xff]
    %v344 = vld [vmem:[#allocation6 + $0x90] sm:$0xff]
    %v345 = vld [vmem:[#allocation6 + $0x98] sm:$0xff]
    %v346 = vld [vmem:[#allocation6 + $0xa0] sm:$0xff]
    %v347 = vld [vmem:[#allocation6 + $0xa8] sm:$0xff]
    %v348 = vld [vmem:[#allocation6 + $0xb0] sm:$0xff]
    %v349 = vld [vmem:[#allocation6 + $0xb8] sm:$0xff]
    %v350 = vld [vmem:[#allocation6 + $0xc0] sm:$0xff]
    %v351 = vld [vmem:[#allocation6 + $0xc8] sm:$0xff]
    %v352 = vld [vmem:[#allocation6 + $0xd0] sm:$0xff]
    %v353 = vld [vmem:[#allocation6 + $0xd8] sm:$0xff]
    %v354 = vld [vmem:[#allocation6 + $0xe0] sm:$0xff]
    %v355 = vld [vmem:[#allocation6 + $0xe8] sm:$0xff]
    %v356 = vld [vmem:[#allocation6 + $0xf0] sm:$0xff]
    %v357 = vld [vmem:[#allocation6 + $0xf8] sm:$0xff]
    %v358 = vld [vmem:[#allocation6 + $0x100] sm:$0xff]
    %v359 = vld [vmem:[#allocation6 + $0x108] sm:$0xff]
    %v360 = vld [vmem:[#allocation6 + $0x110] sm:$0xff]
    %v361 = vld [vmem:[#allocation6 + $0x118] sm:$0xff]
    %v362 = vld [vmem:[#allocation6 + $0x120] sm:$0xff]
    %v363 = vld [vmem:[#allocation6 + $0x128] sm:$0xff]
    %v364 = vld [vmem:[#allocation6 + $0x130] sm:$0xff]
    %v365 = vld [vmem:[#allocation6 + $0x138] sm:$0xff]
    %v366 = vld [vmem:[#allocation6 + $0x140] sm:$0xff]
    %v367 = vld [vmem:[#allocation6 + $0x148] sm:$0xff]
    %v368 = vld [vmem:[#allocation6 + $0x150] sm:$0xff]
    %v369 = vld [vmem:[#allocation6 + $0x158] sm:$0xff]
    %v370 = vld [vmem:[#allocation6 + $0x160] sm:$0xff]
    %v371 = vld [vmem:[#allocation6 + $0x168] sm:$0xff]
    %v372 = vld [vmem:[#allocation6 + $0x170] sm:$0xff]
    %v373 = vld [vmem:[#allocation6 + $0x178] sm:$0xff]
    %v374 = vld [vmem:[#allocation6 + $0x180] sm:$0xff]
    %v375 = vld [vmem:[#allocation6 + $0x188] sm:$0xff]
    %v376 = vld [vmem:[#allocation6 + $0x190] sm:$0xff]
    %v377 = vld [vmem:[#allocation6 + $0x198] sm:$0xff]
    %v378 = vld [vmem:[#allocation6 + $0x1a0] sm:$0xff]
    %v379 = vld [vmem:[#allocation6 + $0x1a8] sm:$0xff]
    %v380 = vld [vmem:[#allocation6 + $0x1b0] sm:$0xff]
    %v381 = vld [vmem:[#allocation6 + $0x1b8] sm:$0xff]
    %v382 = vld [vmem:[#allocation6 + $0x1c0] sm:$0xff]
    %v383 = vld [vmem:[#allocation6 + $0x1c8] sm:$0xff]
    %v384 = vld [vmem:[#allocation6 + $0x1d0] sm:$0xff]
    %v385 = vld [vmem:[#allocation6 + $0x1d8] sm:$0xff]
    %v386 = vld [vmem:[#allocation6 + $0x1e0] sm:$0xff]
    %v387 = vld [vmem:[#allocation6 + $0x1e8] sm:$0xff]
    %v388 = vld [vmem:[#allocation6 + $0x1f0] sm:$0xff]
    %v389 = vld [vmem:[#allocation6 + $0x1f8] sm:$0xff]
    %v390 = vld [vmem:[#allocation6 + $0x200] sm:$0xff]
    %v391 = vld [vmem:[#allocation6 + $0x208] sm:$0xff]
    %v392 = vld [vmem:[#allocation6 + $0x210] sm:$0xff]
    %v393 = vld [vmem:[#allocation6 + $0x218] sm:$0xff]
    %v394 = vld [vmem:[#allocation6 + $0x220] sm:$0xff]
    %v395 = vld [vmem:[#allocation6 + $0x228] sm:$0xff]
    %v396 = vld [vmem:[#allocation6 + $0x230] sm:$0xff]
    %v397 = vld [vmem:[#allocation6 + $0x238] sm:$0xff]
    %v398 = vld [vmem:[#allocation6 + $0x240] sm:$0xff]
    %v399 = vld [vmem:[#allocation6 + $0x248] sm:$0xff]
    %v400 = vld [vmem:[#allocation6 + $0x250] sm:$0xff]
    %v401 = vld [vmem:[#allocation6 + $0x258] sm:$0xff]
    %v402 = vld [vmem:[#allocation6 + $0x260] sm:$0xff]
    %v403 = vld [vmem:[#allocation6 + $0x268] sm:$0xff]
    %v404 = vld [vmem:[#allocation6 + $0x270] sm:$0xff]
    %v405 = vld [vmem:[#allocation6 + $0x278] sm:$0xff]
    %v406 = vld [vmem:[#allocation6 + $0x280] sm:$0xff]
    %v407 = vld [vmem:[#allocation6 + $0x288] sm:$0xff]
    %v408 = vld [vmem:[#allocation6 + $0x290] sm:$0xff]
    %v409 = vld [vmem:[#allocation6 + $0x298] sm:$0xff]
    %v410 = vld [vmem:[#allocation6 + $0x2a0] sm:$0xff]
    %v411 = vld [vmem:[#allocation6 + $0x2a8] sm:$0xff]
    %v412 = vld [vmem:[#allocation6 + $0x2b0] sm:$0xff]
    %v413 = vld [vmem:[#allocation6 + $0x2b8] sm:$0xff]
    %v414 = vld [vmem:[#allocation6 + $0x2c0] sm:$0xff]
    %v415 = vld [vmem:[#allocation6 + $0x2c8] sm:$0xff]
    %v416 = vld [vmem:[#allocation6 + $0x2d0] sm:$0xff]
    %v417 = vld [vmem:[#allocation6 + $0x2d8] sm:$0xff]
    %v418 = vld [vmem:[#allocation6 + $0x2e0] sm:$0xff]
    %v419 = vld [vmem:[#allocation6 + $0x2e8] sm:$0xff]
    %v420 = vld [vmem:[#allocation6 + $0x2f0] sm:$0xff]
    %v421 = vld [vmem:[#allocation6 + $0x2f8] sm:$0xff]
    %v422 = vld [vmem:[#allocation6 + $0x300] sm:$0xff]
    %v423 = vld [vmem:[#allocation6 + $0x308] sm:$0xff]
    %v424 = vld [vmem:[#allocation6 + $0x310] sm:$0xff]
    %v425 = vld [vmem:[#allocation6 + $0x318] sm:$0xff]
    %v426 = vld [vmem:[#allocation6 + $0x320] sm:$0xff]
    %v427 = vld [vmem:[#allocation6 + $0x328] sm:$0xff]
    %v428 = vld [vmem:[#allocation6 + $0x330] sm:$0xff]
    %v429 = vld [vmem:[#allocation6 + $0x338] sm:$0xff]
    %v430 = vld [vmem:[#allocation6 + $0x340] sm:$0xff]
    %v431 = vld [vmem:[#allocation6 + $0x348] sm:$0xff]
    %v432 = vld [vmem:[#allocation6 + $0x350] sm:$0xff]
    %v433 = vld [vmem:[#allocation6 + $0x358] sm:$0xff]
    %v434 = vld [vmem:[#allocation6 + $0x360] sm:$0xff]
    %v435 = vld [vmem:[#allocation6 + $0x368] sm:$0xff]
    %v436 = vld [vmem:[#allocation6 + $0x370] sm:$0xff]
    %v437 = vld [vmem:[#allocation6 + $0x378] sm:$0xff]
    %v438 = vld [vmem:[#allocation6 + $0x380] sm:$0xff]
    %v439 = vld [vmem:[#allocation6 + $0x388] sm:$0xff]
    %v440 = vld [vmem:[#allocation6 + $0x390] sm:$0xff]
    %v441 = vld [vmem:[#allocation6 + $0x398] sm:$0xff]
    %v442 = vld [vmem:[#allocation6 + $0x3a0] sm:$0xff]
    %v443 = vld [vmem:[#allocation6 + $0x3a8] sm:$0xff]
    %v444 = vld [vmem:[#allocation6 + $0x3b0] sm:$0xff]
    %v445 = vld [vmem:[#allocation6 + $0x3b8] sm:$0xff]
    %v446 = vld [vmem:[#allocation6 + $0x3c0] sm:$0xff]
    %v447 = vld [vmem:[#allocation6 + $0x3c8] sm:$0xff]
    %v448 = vld [vmem:[#allocation6 + $0x3d0] sm:$0xff]
    %v449 = vld [vmem:[#allocation6 + $0x3d8] sm:$0xff]
    %v450 = vld [vmem:[#allocation6 + $0x3e0] sm:$0xff]
    %v451 = vld [vmem:[#allocation6 + $0x3e8] sm:$0xff]
    %v452 = vld [vmem:[#allocation6 + $0x3f0] sm:$0xff]
    %v453 = vld [vmem:[#allocation6 + $0x3f8] sm:$0xff]
    %v454 = vld [vmem:[#allocation6 + $0x400] sm:$0xff]
    %v455 = vld [vmem:[#allocation6 + $0x408] sm:$0xff]
    %v456 = vld [vmem:[#allocation6 + $0x410] sm:$0xff]
    %v457 = vld [vmem:[#allocation6 + $0x418] sm:$0xff]
    %v458 = vld [vmem:[#allocation6 + $0x420] sm:$0xff]
    %v459 = vld [vmem:[#allocation6 + $0x428] sm:$0xff]
    %v460 = vld [vmem:[#allocation6 + $0x430] sm:$0xff]
    %v461 = vld [vmem:[#allocation6 + $0x438] sm:$0xff]
    %v462 = vld [vmem:[#allocation6 + $0x440] sm:$0xff]
    %v463 = vld [vmem:[#allocation6 + $0x448] sm:$0xff]
    %v464 = vld [vmem:[#allocation6 + $0x450] sm:$0xff]
    %v465 = vld [vmem:[#allocation6 + $0x458] sm:$0xff]
    %v466 = vld [vmem:[#allocation6 + $0x460] sm:$0xff]
    %v467 = vld [vmem:[#allocation6 + $0x468] sm:$0xff]
    %v468 = vld [vmem:[#allocation6 + $0x470] sm:$0xff]
    %v469 = vld [vmem:[#allocation6 + $0x478] sm:$0xff]
    %v470 = vld [vmem:[#allocation6 + $0x480] sm:$0xff]
    %v471 = vld [vmem:[#allocation6 + $0x488] sm:$0xff]
    %v472 = vld [vmem:[#allocation6 + $0x490] sm:$0xff]
    %v473 = vld [vmem:[#allocation6 + $0x498] sm:$0xff]
    %v474 = vld [vmem:[#allocation6 + $0x4a0] sm:$0xff]
    %v475 = vld [vmem:[#allocation6 + $0x4a8] sm:$0xff]
    %v476 = vld [vmem:[#allocation6 + $0x4b0] sm:$0xff]
    %v477 = vld [vmem:[#allocation6 + $0x4b8] sm:$0xff]
    %v478 = vld [vmem:[#allocation6 + $0x4c0] sm:$0xff]
    %v479 = vld [vmem:[#allocation6 + $0x4c8] sm:$0xff]
    %v480 = vld [vmem:[#allocation6 + $0x4d0] sm:$0xff]
    %v481 = vld [vmem:[#allocation6 + $0x4d8] sm:$0xff]
    %v482 = vld [vmem:[#allocation6 + $0x4e0] sm:$0xff]
    %v483 = vld [vmem:[#allocation6 + $0x4e8] sm:$0xff]
    %v484 = vld [vmem:[#allocation6 + $0x4f0] sm:$0xff]
    %v485 = vld [vmem:[#allocation6 + $0x4f8] sm:$0xff]
    %v486 = vld [vmem:[#allocation6 + $0x500] sm:$0xff]
    %v487 = vld [vmem:[#allocation6 + $0x508] sm:$0xff]
    %v488 = vld [vmem:[#allocation6 + $0x510] sm:$0xff]
    %v489 = vld [vmem:[#allocation6 + $0x518] sm:$0xff]
    %v490 = vld [vmem:[#allocation6 + $0x520] sm:$0xff]
    %v491 = vld [vmem:[#allocation6 + $0x528] sm:$0xff]
    %v492 = vld [vmem:[#allocation6 + $0x530] sm:$0xff]
    %v493 = vld [vmem:[#allocation6 + $0x538] sm:$0xff]
    %v494 = vld [vmem:[#allocation6 + $0x540] sm:$0xff]
    %v495 = vld [vmem:[#allocation6 + $0x548] sm:$0xff]
    %v496 = vld [vmem:[#allocation6 + $0x550] sm:$0xff]
    %v497 = vld [vmem:[#allocation6 + $0x558] sm:$0xff]
    %v498 = vld [vmem:[#allocation6 + $0x560] sm:$0xff]
    %v499 = vld [vmem:[#allocation6 + $0x568] sm:$0xff]
    %v500 = vld [vmem:[#allocation6 + $0x570] sm:$0xff]
    %v501 = vld [vmem:[#allocation6 + $0x578] sm:$0xff]
    %v502 = vld [vmem:[#allocation6 + $0x580] sm:$0xff]
    %v503 = vld [vmem:[#allocation6 + $0x588] sm:$0xff]
    %v504 = vld [vmem:[#allocation6 + $0x590] sm:$0xff]
    %v505 = vld [vmem:[#allocation6 + $0x598] sm:$0xff]
    %v506 = vld [vmem:[#allocation6 + $0x5a0] sm:$0xff]
    %v507 = vld [vmem:[#allocation6 + $0x5a8] sm:$0xff]
    %v508 = vld [vmem:[#allocation6 + $0x5b0] sm:$0xff]
    %v509 = vld [vmem:[#allocation6 + $0x5b8] sm:$0xff]
    %v510 = vld [vmem:[#allocation6 + $0x5c0] sm:$0xff]
    %v511 = vld [vmem:[#allocation6 + $0x5c8] sm:$0xff]
    %v512 = vld [vmem:[#allocation6 + $0x5d0] sm:$0xff]
    %v513 = vld [vmem:[#allocation6 + $0x5d8] sm:$0xff]
    %v514 = vld [vmem:[#allocation6 + $0x5e0] sm:$0xff]
    %v515 = vld [vmem:[#allocation6 + $0x5e8] sm:$0xff]
    %v516 = vld [vmem:[#allocation6 + $0x5f0] sm:$0xff]
    %v517 = vld [vmem:[#allocation6 + $0x5f8] sm:$0xff]
    %v518 = vld [vmem:[#allocation6 + $0x600] sm:$0xff]
    %v519 = vld [vmem:[#allocation6 + $0x608] sm:$0xff]
    %v520 = vld [vmem:[#allocation6 + $0x610] sm:$0xff]
    %v521 = vld [vmem:[#allocation6 + $0x618] sm:$0xff]
    %v522 = vld [vmem:[#allocation6 + $0x620] sm:$0xff]
    %v523 = vld [vmem:[#allocation6 + $0x628] sm:$0xff]
    %v524 = vld [vmem:[#allocation6 + $0x630] sm:$0xff]
    %v525 = vld [vmem:[#allocation6 + $0x638] sm:$0xff]
    %v526 = vld [vmem:[#allocation6 + $0x640] sm:$0xff]
    %v527 = vld [vmem:[#allocation6 + $0x648] sm:$0xff]
    %v528 = vld [vmem:[#allocation6 + $0x650] sm:$0xff]
    %v529 = vld [vmem:[#allocation6 + $0x658] sm:$0xff]
    %v530 = vld [vmem:[#allocation6 + $0x660] sm:$0xff]
    %v531 = vld [vmem:[#allocation6 + $0x668] sm:$0xff]
    %v532 = vld [vmem:[#allocation6 + $0x670] sm:$0xff]
    %v533 = vld [vmem:[#allocation6 + $0x678] sm:$0xff]
    %v534 = vld [vmem:[#allocation6 + $0x680] sm:$0xff]
    %v535 = vld [vmem:[#allocation6 + $0x688] sm:$0xff]
    %v536 = vld [vmem:[#allocation6 + $0x690] sm:$0xff]
    %v537 = vld [vmem:[#allocation6 + $0x698] sm:$0xff]
    %v538 = vld [vmem:[#allocation6 + $0x6a0] sm:$0xff]
    %v539 = vld [vmem:[#allocation6 + $0x6a8] sm:$0xff]
    %v540 = vld [vmem:[#allocation6 + $0x6b0] sm:$0xff]
    %v541 = vld [vmem:[#allocation6 + $0x6b8] sm:$0xff]
    %v542 = vld [vmem:[#allocation6 + $0x6c0] sm:$0xff]
    %v543 = vld [vmem:[#allocation6 + $0x6c8] sm:$0xff]
    %v544 = vld [vmem:[#allocation6 + $0x6d0] sm:$0xff]
    %v545 = vld [vmem:[#allocation6 + $0x6d8] sm:$0xff]
    %v546 = vld [vmem:[#allocation6 + $0x6e0] sm:$0xff]
    %v547 = vld [vmem:[#allocation6 + $0x6e8] sm:$0xff]
    %v548 = vld [vmem:[#allocation6 + $0x6f0] sm:$0xff]
    %v549 = vld [vmem:[#allocation6 + $0x6f8] sm:$0xff]
    %v550 = vld [vmem:[#allocation6 + $0x700] sm:$0xff]
    %v551 = vld [vmem:[#allocation6 + $0x708] sm:$0xff]
    %v552 = vld [vmem:[#allocation6 + $0x710] sm:$0xff]
    %v553 = vld [vmem:[#allocation6 + $0x718] sm:$0xff]
    %v554 = vld [vmem:[#allocation6 + $0x720] sm:$0xff]
    %v555 = vld [vmem:[#allocation6 + $0x728] sm:$0xff]
    %v556 = vld [vmem:[#allocation6 + $0x730] sm:$0xff]
    %v557 = vld [vmem:[#allocation6 + $0x738] sm:$0xff]
    %v558 = vld [vmem:[#allocation6 + $0x740] sm:$0xff]
    %v559 = vld [vmem:[#allocation6 + $0x748] sm:$0xff]
    %v560 = vld [vmem:[#allocation6 + $0x750] sm:$0xff]
    %v561 = vld [vmem:[#allocation6 + $0x758] sm:$0xff]
    %v562 = vld [vmem:[#allocation6 + $0x760] sm:$0xff]
    %v563 = vld [vmem:[#allocation6 + $0x768] sm:$0xff]
    %v564 = vld [vmem:[#allocation6 + $0x770] sm:$0xff]
    %v565 = vld [vmem:[#allocation6 + $0x778] sm:$0xff]
    %v566 = vld [vmem:[#allocation6 + $0x780] sm:$0xff]
    %v567 = vld [vmem:[#allocation6 + $0x788] sm:$0xff]
    %v568 = vld [vmem:[#allocation6 + $0x790] sm:$0xff]
    %v569 = vld [vmem:[#allocation6 + $0x798] sm:$0xff]
    %v570 = vld [vmem:[#allocation6 + $0x7a0] sm:$0xff]
    %v571 = vld [vmem:[#allocation6 + $0x7a8] sm:$0xff]
    %v572 = vld [vmem:[#allocation6 + $0x7b0] sm:$0xff]
    %v573 = vld [vmem:[#allocation6 + $0x7b8] sm:$0xff]
    %v574 = vld [vmem:[#allocation6 + $0x7c0] sm:$0xff]
    %v575 = vld [vmem:[#allocation6 + $0x7c8] sm:$0xff]
    %v576 = vld [vmem:[#allocation6 + $0x7d0] sm:$0xff]
    %v577 = vld [vmem:[#allocation6 + $0x7d8] sm:$0xff]
    %v578 = vld [vmem:[#allocation6 + $0x7e0] sm:$0xff]
    %v579 = vld [vmem:[#allocation6 + $0x7e8] sm:$0xff]
    %v580 = vld [vmem:[#allocation6 + $0x7f0] sm:$0xff]
    %v581 = vld [vmem:[#allocation6 + $0x7f8] sm:$0xff]
    %v582 = vsub.f32 %v70, %v326
    %v583 = vsub.f32 %v71, %v327
    %v584 = vsub.f32 %v72, %v328
    %v585 = vsub.f32 %v73, %v329
    %v586 = vsub.f32 %v74, %v330
    %v587 = vsub.f32 %v75, %v331
    %v588 = vsub.f32 %v76, %v332
    %v589 = vsub.f32 %v77, %v333
    %v590 = vsub.f32 %v78, %v334
    %v591 = vsub.f32 %v79, %v335
    %v592 = vsub.f32 %v80, %v336
    %v593 = vsub.f32 %v81, %v337
    %v594 = vsub.f32 %v82, %v338
    %v595 = vsub.f32 %v83, %v339
    %v596 = vsub.f32 %v84, %v340
    %v597 = vsub.f32 %v85, %v341
    %v598 = vsub.f32 %v86, %v342
    %v599 = vsub.f32 %v87, %v343
    %v600 = vsub.f32 %v88, %v344
    %v601 = vsub.f32 %v89, %v345
    %v602 = vsub.f32 %v90, %v346
    %v603 = vsub.f32 %v91, %v347
    %v604 = vsub.f32 %v92, %v348
    %v605 = vsub.f32 %v93, %v349
    %v606 = vsub.f32 %v94, %v350
    %v607 = vsub.f32 %v95, %v351
    %v608 = vsub.f32 %v96, %v352
    %v609 = vsub.f32 %v97, %v353
    %v610 = vsub.f32 %v98, %v354
    %v611 = vsub.f32 %v99, %v355
    %v612 = vsub.f32 %v100, %v356
    %v613 = vsub.f32 %v101, %v357
    %v614 = vsub.f32 %v102, %v358
    %v615 = vsub.f32 %v103, %v359
    %v616 = vsub.f32 %v104, %v360
    %v617 = vsub.f32 %v105, %v361
    %v618 = vsub.f32 %v106, %v362
    %v619 = vsub.f32 %v107, %v363
    %v620 = vsub.f32 %v108, %v364
    %v621 = vsub.f32 %v109, %v365
    %v622 = vsub.f32 %v110, %v366
    %v623 = vsub.f32 %v111, %v367
    %v624 = vsub.f32 %v112, %v368
    %v625 = vsub.f32 %v113, %v369
    %v626 = vsub.f32 %v114, %v370
    %v627 = vsub.f32 %v115, %v371
    %v628 = vsub.f32 %v116, %v372
    %v629 = vsub.f32 %v117, %v373
    %v630 = vsub.f32 %v118, %v374
    %v631 = vsub.f32 %v119, %v375
    %v632 = vsub.f32 %v120, %v376
    %v633 = vsub.f32 %v121, %v377
    %v634 = vsub.f32 %v122, %v378
    %v635 = vsub.f32 %v123, %v379
    %v636 = vsub.f32 %v124, %v380
    %v637 = vsub.f32 %v125, %v381
    %v638 = vsub.f32 %v126, %v382
    %v639 = vsub.f32 %v127, %v383
    %v640 = vsub.f32 %v128, %v384
    %v641 = vsub.f32 %v129, %v385
    %v642 = vsub.f32 %v130, %v386
    %v643 = vsub.f32 %v131, %v387
    %v644 = vsub.f32 %v132, %v388
    %v645 = vsub.f32 %v133, %v389
    %v646 = vsub.f32 %v134, %v390
    %v647 = vsub.f32 %v135, %v391
    %v648 = vsub.f32 %v136, %v392
    %v649 = vsub.f32 %v137, %v393
    %v650 = vsub.f32 %v138, %v394
    %v651 = vsub.f32 %v139, %v395
    %v652 = vsub.f32 %v140, %v396
    %v653 = vsub.f32 %v141, %v397
    %v654 = vsub.f32 %v142, %v398
    %v655 = vsub.f32 %v143, %v399
    %v656 = vsub.f32 %v144, %v400
    %v657 = vsub.f32 %v145, %v401
    %v658 = vsub.f32 %v146, %v402
    %v659 = vsub.f32 %v147, %v403
    %v660 = vsub.f32 %v148, %v404
    %v661 = vsub.f32 %v149, %v405
    %v662 = vsub.f32 %v150, %v406
    %v663 = vsub.f32 %v151, %v407
    %v664 = vsub.f32 %v152, %v408
    %v665 = vsub.f32 %v153, %v409
    %v666 = vsub.f32 %v154, %v410
    %v667 = vsub.f32 %v155, %v411
    %v668 = vsub.f32 %v156, %v412
    %v669 = vsub.f32 %v157, %v413
    %v670 = vsub.f32 %v158, %v414
    %v671 = vsub.f32 %v159, %v415
    %v672 = vsub.f32 %v160, %v416
    %v673 = vsub.f32 %v161, %v417
    %v674 = vsub.f32 %v162, %v418
    %v675 = vsub.f32 %v163, %v419
    %v676 = vsub.f32 %v164, %v420
    %v677 = vsub.f32 %v165, %v421
    %v678 = vsub.f32 %v166, %v422
    %v679 = vsub.f32 %v167, %v423
    %v680 = vsub.f32 %v168, %v424
    %v681 = vsub.f32 %v169, %v425
    %v682 = vsub.f32 %v170, %v426
    %v683 = vsub.f32 %v171, %v427
    %v684 = vsub.f32 %v172, %v428
    %v685 = vsub.f32 %v173, %v429
    %v686 = vsub.f32 %v174, %v430
    %v687 = vsub.f32 %v175, %v431
    %v688 = vsub.f32 %v176, %v432
    %v689 = vsub.f32 %v177, %v433
    %v690 = vsub.f32 %v178, %v434
    %v691 = vsub.f32 %v179, %v435
    %v692 = vsub.f32 %v180, %v436
    %v693 = vsub.f32 %v181, %v437
    %v694 = vsub.f32 %v182, %v438
    %v695 = vsub.f32 %v183, %v439
    %v696 = vsub.f32 %v184, %v440
    %v697 = vsub.f32 %v185, %v441
    %v698 = vsub.f32 %v186, %v442
    %v699 = vsub.f32 %v187, %v443
    %v700 = vsub.f32 %v188, %v444
    %v701 = vsub.f32 %v189, %v445
    %v702 = vsub.f32 %v190, %v446
    %v703 = vsub.f32 %v191, %v447
    %v704 = vsub.f32 %v192, %v448
    %v705 = vsub.f32 %v193, %v449
    %v706 = vsub.f32 %v194, %v450
    %v707 = vsub.f32 %v195, %v451
    %v708 = vsub.f32 %v196, %v452
    %v709 = vsub.f32 %v197, %v453
    %v710 = vsub.f32 %v198, %v454
    %v711 = vsub.f32 %v199, %v455
    %v712 = vsub.f32 %v200, %v456
    %v713 = vsub.f32 %v201, %v457
    %v714 = vsub.f32 %v202, %v458
    %v715 = vsub.f32 %v203, %v459
    %v716 = vsub.f32 %v204, %v460
    %v717 = vsub.f32 %v205, %v461
    %v718 = vsub.f32 %v206, %v462
    %v719 = vsub.f32 %v207, %v463
    %v720 = vsub.f32 %v208, %v464
    %v721 = vsub.f32 %v209, %v465
    %v722 = vsub.f32 %v210, %v466
    %v723 = vsub.f32 %v211, %v467
    %v724 = vsub.f32 %v212, %v468
    %v725 = vsub.f32 %v213, %v469
    %v726 = vsub.f32 %v214, %v470
    %v727 = vsub.f32 %v215, %v471
    %v728 = vsub.f32 %v216, %v472
    %v729 = vsub.f32 %v217, %v473
    %v730 = vsub.f32 %v218, %v474
    %v731 = vsub.f32 %v219, %v475
    %v732 = vsub.f32 %v220, %v476
    %v733 = vsub.f32 %v221, %v477
    %v734 = vsub.f32 %v222, %v478
    %v735 = vsub.f32 %v223, %v479
    %v736 = vsub.f32 %v224, %v480
    %v737 = vsub.f32 %v225, %v481
    %v738 = vsub.f32 %v226, %v482
    %v739 = vsub.f32 %v227, %v483
    %v740 = vsub.f32 %v228, %v484
    %v741 = vsub.f32 %v229, %v485
    %v742 = vsub.f32 %v230, %v486
    %v743 = vsub.f32 %v231, %v487
    %v744 = vsub.f32 %v232, %v488
    %v745 = vsub.f32 %v233, %v489
    %v746 = vsub.f32 %v234, %v490
    %v747 = vsub.f32 %v235, %v491
    %v748 = vsub.f32 %v236, %v492
    %v749 = vsub.f32 %v237, %v493
    %v750 = vsub.f32 %v238, %v494
    %v751 = vsub.f32 %v239, %v495
    %v752 = vsub.f32 %v240, %v496
    %v753 = vsub.f32 %v241, %v497
    %v754 = vsub.f32 %v242, %v498
    %v755 = vsub.f32 %v243, %v499
    %v756 = vsub.f32 %v244, %v500
    %v757 = vsub.f32 %v245, %v501
    %v758 = vsub.f32 %v246, %v502
    %v759 = vsub.f32 %v247, %v503
    %v760 = vsub.f32 %v248, %v504
    %v761 = vsub.f32 %v249, %v505
    %v762 = vsub.f32 %v250, %v506
    %v763 = vsub.f32 %v251, %v507
    %v764 = vsub.f32 %v252, %v508
    %v765 = vsub.f32 %v253, %v509
    %v766 = vsub.f32 %v254, %v510
    %v767 = vsub.f32 %v255, %v511
    %v768 = vsub.f32 %v256, %v512
    %v769 = vsub.f32 %v257, %v513
    %v770 = vsub.f32 %v258, %v514
    %v771 = vsub.f32 %v259, %v515
    %v772 = vsub.f32 %v260, %v516
    %v773 = vsub.f32 %v261, %v517
    %v774 = vsub.f32 %v262, %v518
    %v775 = vsub.f32 %v263, %v519
    %v776 = vsub.f32 %v264, %v520
    %v777 = vsub.f32 %v265, %v521
    %v778 = vsub.f32 %v266, %v522
    %v779 = vsub.f32 %v267, %v523
    %v780 = vsub.f32 %v268, %v524
    %v781 = vsub.f32 %v269, %v525
    %v782 = vsub.f32 %v270, %v526
    %v783 = vsub.f32 %v271, %v527
    %v784 = vsub.f32 %v272, %v528
    %v785 = vsub.f32 %v273, %v529
    %v786 = vsub.f32 %v274, %v530
    %v787 = vsub.f32 %v275, %v531
    %v788 = vsub.f32 %v276, %v532
    %v789 = vsub.f32 %v277, %v533
    %v790 = vsub.f32 %v278, %v534
    %v791 = vsub.f32 %v279, %v535
    %v792 = vsub.f32 %v280, %v536
    %v793 = vsub.f32 %v281, %v537
    %v794 = vsub.f32 %v282, %v538
    %v795 = vsub.f32 %v283, %v539
    %v796 = vsub.f32 %v284, %v540
    %v797 = vsub.f32 %v285, %v541
    %v798 = vsub.f32 %v286, %v542
    %v799 = vsub.f32 %v287, %v543
    %v800 = vsub.f32 %v288, %v544
    %v801 = vsub.f32 %v289, %v545
    %v802 = vsub.f32 %v290, %v546
    %v803 = vsub.f32 %v291, %v547
    %v804 = vsub.f32 %v292, %v548
    %v805 = vsub.f32 %v293, %v549
    %v806 = vsub.f32 %v294, %v550
    %v807 = vsub.f32 %v295, %v551
    %v808 = vsub.f32 %v296, %v552
    %v809 = vsub.f32 %v297, %v553
    %v810 = vsub.f32 %v298, %v554
    %v811 = vsub.f32 %v299, %v555
    %v812 = vsub.f32 %v300, %v556
    %v813 = vsub.f32 %v301, %v557
    %v814 = vsub.f32 %v302, %v558
    %v815 = vsub.f32 %v303, %v559
    %v816 = vsub.f32 %v304, %v560
    %v817 = vsub.f32 %v305, %v561
    %v818 = vsub.f32 %v306, %v562
    %v819 = vsub.f32 %v307, %v563
    %v820 = vsub.f32 %v308, %v564
    %v821 = vsub.f32 %v309, %v565
    %v822 = vsub.f32 %v310, %v566
    %v823 = vsub.f32 %v311, %v567
    %v824 = vsub.f32 %v312, %v568
    %v825 = vsub.f32 %v313, %v569
    %v826 = vsub.f32 %v314, %v570
    %v827 = vsub.f32 %v315, %v571
    %v828 = vsub.f32 %v316, %v572
    %v829 = vsub.f32 %v317, %v573
    %v830 = vsub.f32 %v318, %v574
    %v831 = vsub.f32 %v319, %v575
    %v832 = vsub.f32 %v320, %v576
    %v833 = vsub.f32 %v321, %v577
    %v834 = vsub.f32 %v322, %v578
    %v835 = vsub.f32 %v323, %v579
    %v836 = vsub.f32 %v324, %v580
    %v837 = vsub.f32 %v325, %v581
    %v838 = vmul.f32 %v582, %v582
    %v839 = vmul.f32 %v583, %v583
    %v840 = vmul.f32 %v584, %v584
    %v841 = vmul.f32 %v585, %v585
    %v842 = vmul.f32 %v586, %v586
    %v843 = vmul.f32 %v587, %v587
    %v844 = vmul.f32 %v588, %v588
    %v845 = vmul.f32 %v589, %v589
    %v846 = vmul.f32 %v590, %v590
    %v847 = vmul.f32 %v591, %v591
    %v848 = vmul.f32 %v592, %v592
    %v849 = vmul.f32 %v593, %v593
    %v850 = vmul.f32 %v594, %v594
    %v851 = vmul.f32 %v595, %v595
    %v852 = vmul.f32 %v596, %v596
    %v853 = vmul.f32 %v597, %v597
    %v854 = vmul.f32 %v598, %v598
    %v855 = vmul.f32 %v599, %v599
    %v856 = vmul.f32 %v600, %v600
    %v857 = vmul.f32 %v601, %v601
    %v858 = vmul.f32 %v602, %v602
    %v859 = vmul.f32 %v603, %v603
    %v860 = vmul.f32 %v604, %v604
    %v861 = vmul.f32 %v605, %v605
    %v862 = vmul.f32 %v606, %v606
    %v863 = vmul.f32 %v607, %v607
    %v864 = vmul.f32 %v608, %v608
    %v865 = vmul.f32 %v609, %v609
    %v866 = vmul.f32 %v610, %v610
    %v867 = vmul.f32 %v611, %v611
    %v868 = vmul.f32 %v612, %v612
    %v869 = vmul.f32 %v613, %v613
    %v870 = vmul.f32 %v614, %v614
    %v871 = vmul.f32 %v615, %v615
    %v872 = vmul.f32 %v616, %v616
    %v873 = vmul.f32 %v617, %v617
    %v874 = vmul.f32 %v618, %v618
    %v875 = vmul.f32 %v619, %v619
    %v876 = vmul.f32 %v620, %v620
    %v877 = vmul.f32 %v621, %v621
    %v878 = vmul.f32 %v622, %v622
    %v879 = vmul.f32 %v623, %v623
    %v880 = vmul.f32 %v624, %v624
    %v881 = vmul.f32 %v625, %v625
    %v882 = vmul.f32 %v626, %v626
    %v883 = vmul.f32 %v627, %v627
    %v884 = vmul.f32 %v628, %v628
    %v885 = vmul.f32 %v629, %v629
    %v886 = vmul.f32 %v630, %v630
    %v887 = vmul.f32 %v631, %v631
    %v888 = vmul.f32 %v632, %v632
    %v889 = vmul.f32 %v633, %v633
    %v890 = vmul.f32 %v634, %v634
    %v891 = vmul.f32 %v635, %v635
    %v892 = vmul.f32 %v636, %v636
    %v893 = vmul.f32 %v637, %v637
    %v894 = vmul.f32 %v638, %v638
    %v895 = vmul.f32 %v639, %v639
    %v896 = vmul.f32 %v640, %v640
    %v897 = vmul.f32 %v641, %v641
    %v898 = vmul.f32 %v642, %v642
    %v899 = vmul.f32 %v643, %v643
    %v900 = vmul.f32 %v644, %v644
    %v901 = vmul.f32 %v645, %v645
    %v902 = vmul.f32 %v646, %v646
    %v903 = vmul.f32 %v647, %v647
    %v904 = vmul.f32 %v648, %v648
    %v905 = vmul.f32 %v649, %v649
    %v906 = vmul.f32 %v650, %v650
    %v907 = vmul.f32 %v651, %v651
    %v908 = vmul.f32 %v652, %v652
    %v909 = vmul.f32 %v653, %v653
    %v910 = vmul.f32 %v654, %v654
    %v911 = vmul.f32 %v655, %v655
    %v912 = vmul.f32 %v656, %v656
    %v913 = vmul.f32 %v657, %v657
    %v914 = vmul.f32 %v658, %v658
    %v915 = vmul.f32 %v659, %v659
    %v916 = vmul.f32 %v660, %v660
    %v917 = vmul.f32 %v661, %v661
    %v918 = vmul.f32 %v662, %v662
    %v919 = vmul.f32 %v663, %v663
    %v920 = vmul.f32 %v664, %v664
    %v921 = vmul.f32 %v665, %v665
    %v922 = vmul.f32 %v666, %v666
    %v923 = vmul.f32 %v667, %v667
    %v924 = vmul.f32 %v668, %v668
    %v925 = vmul.f32 %v669, %v669
    %v926 = vmul.f32 %v670, %v670
    %v927 = vmul.f32 %v671, %v671
    %v928 = vmul.f32 %v672, %v672
    %v929 = vmul.f32 %v673, %v673
    %v930 = vmul.f32 %v674, %v674
    %v931 = vmul.f32 %v675, %v675
    %v932 = vmul.f32 %v676, %v676
    %v933 = vmul.f32 %v677, %v677
    %v934 = vmul.f32 %v678, %v678
    %v935 = vmul.f32 %v679, %v679
    %v936 = vmul.f32 %v680, %v680
    %v937 = vmul.f32 %v681, %v681
    %v938 = vmul.f32 %v682, %v682
    %v939 = vmul.f32 %v683, %v683
    %v940 = vmul.f32 %v684, %v684
    %v941 = vmul.f32 %v685, %v685
    %v942 = vmul.f32 %v686, %v686
    %v943 = vmul.f32 %v687, %v687
    %v944 = vmul.f32 %v688, %v688
    %v945 = vmul.f32 %v689, %v689
    %v946 = vmul.f32 %v690, %v690
    %v947 = vmul.f32 %v691, %v691
    %v948 = vmul.f32 %v692, %v692
    %v949 = vmul.f32 %v693, %v693
    %v950 = vmul.f32 %v694, %v694
    %v951 = vmul.f32 %v695, %v695
    %v952 = vmul.f32 %v696, %v696
    %v953 = vmul.f32 %v697, %v697
    %v954 = vmul.f32 %v698, %v698
    %v955 = vmul.f32 %v699, %v699
    %v956 = vmul.f32 %v700, %v700
    %v957 = vmul.f32 %v701, %v701
    %v958 = vmul.f32 %v702, %v702
    %v959 = vmul.f32 %v703, %v703
    %v960 = vmul.f32 %v704, %v704
    %v961 = vmul.f32 %v705, %v705
    %v962 = vmul.f32 %v706, %v706
    %v963 = vmul.f32 %v707, %v707
    %v964 = vmul.f32 %v708, %v708
    %v965 = vmul.f32 %v709, %v709
    %v966 = vmul.f32 %v710, %v710
    %v967 = vmul.f32 %v711, %v711
    %v968 = vmul.f32 %v712, %v712
    %v969 = vmul.f32 %v713, %v713
    %v970 = vmul.f32 %v714, %v714
    %v971 = vmul.f32 %v715, %v715
    %v972 = vmul.f32 %v716, %v716
    %v973 = vmul.f32 %v717, %v717
    %v974 = vmul.f32 %v718, %v718
    %v975 = vmul.f32 %v719, %v719
    %v976 = vmul.f32 %v720, %v720
    %v977 = vmul.f32 %v721, %v721
    %v978 = vmul.f32 %v722, %v722
    %v979 = vmul.f32 %v723, %v723
    %v980 = vmul.f32 %v724, %v724
    %v981 = vmul.f32 %v725, %v725
    %v982 = vmul.f32 %v726, %v726
    %v983 = vmul.f32 %v727, %v727
    %v984 = vmul.f32 %v728, %v728
    %v985 = vmul.f32 %v729, %v729
    %v986 = vmul.f32 %v730, %v730
    %v987 = vmul.f32 %v731, %v731
    %v988 = vmul.f32 %v732, %v732
    %v989 = vmul.f32 %v733, %v733
    %v990 = vmul.f32 %v734, %v734
    %v991 = vmul.f32 %v735, %v735
    %v992 = vmul.f32 %v736, %v736
    %v993 = vmul.f32 %v737, %v737
    %v994 = vmul.f32 %v738, %v738
    %v995 = vmul.f32 %v739, %v739
    %v996 = vmul.f32 %v740, %v740
    %v997 = vmul.f32 %v741, %v741
    %v998 = vmul.f32 %v742, %v742
    %v999 = vmul.f32 %v743, %v743
    %v1000 = vmul.f32 %v744, %v744
    %v1001 = vmul.f32 %v745, %v745
    %v1002 = vmul.f32 %v746, %v746
    %v1003 = vmul.f32 %v747, %v747
    %v1004 = vmul.f32 %v748, %v748
    %v1005 = vmul.f32 %v749, %v749
    %v1006 = vmul.f32 %v750, %v750
    %v1007 = vmul.f32 %v751, %v751
    %v1008 = vmul.f32 %v752, %v752
    %v1009 = vmul.f32 %v753, %v753
    %v1010 = vmul.f32 %v754, %v754
    %v1011 = vmul.f32 %v755, %v755
    %v1012 = vmul.f32 %v756, %v756
    %v1013 = vmul.f32 %v757, %v757
    %v1014 = vmul.f32 %v758, %v758
    %v1015 = vmul.f32 %v759, %v759
    %v1016 = vmul.f32 %v760, %v760
    %v1017 = vmul.f32 %v761, %v761
    %v1018 = vmul.f32 %v762, %v762
    %v1019 = vmul.f32 %v763, %v763
    %v1020 = vmul.f32 %v764, %v764
    %v1021 = vmul.f32 %v765, %v765
    %v1022 = vmul.f32 %v766, %v766
    %v1023 = vmul.f32 %v767, %v767
    %v1024 = vmul.f32 %v768, %v768
    %v1025 = vmul.f32 %v769, %v769
    %v1026 = vmul.f32 %v770, %v770
    %v1027 = vmul.f32 %v771, %v771
    %v1028 = vmul.f32 %v772, %v772
    %v1029 = vmul.f32 %v773, %v773
    %v1030 = vmul.f32 %v774, %v774
    %v1031 = vmul.f32 %v775, %v775
    %v1032 = vmul.f32 %v776, %v776
    %v1033 = vmul.f32 %v777, %v777
    %v1034 = vmul.f32 %v778, %v778
    %v1035 = vmul.f32 %v779, %v779
    %v1036 = vmul.f32 %v780, %v780
    %v1037 = vmul.f32 %v781, %v781
    %v1038 = vmul.f32 %v782, %v782
    %v1039 = vmul.f32 %v783, %v783
    %v1040 = vmul.f32 %v784, %v784
    %v1041 = vmul.f32 %v785, %v785
    %v1042 = vmul.f32 %v786, %v786
    %v1043 = vmul.f32 %v787, %v787
    %v1044 = vmul.f32 %v788, %v788
    %v1045 = vmul.f32 %v789, %v789
    %v1046 = vmul.f32 %v790, %v790
    %v1047 = vmul.f32 %v791, %v791
    %v1048 = vmul.f32 %v792, %v792
    %v1049 = vmul.f32 %v793, %v793
    %v1050 = vmul.f32 %v794, %v794
    %v1051 = vmul.f32 %v795, %v795
    %v1052 = vmul.f32 %v796, %v796
    %v1053 = vmul.f32 %v797, %v797
    %v1054 = vmul.f32 %v798, %v798
    %v1055 = vmul.f32 %v799, %v799
    %v1056 = vmul.f32 %v800, %v800
    %v1057 = vmul.f32 %v801, %v801
    %v1058 = vmul.f32 %v802, %v802
    %v1059 = vmul.f32 %v803, %v803
    %v1060 = vmul.f32 %v804, %v804
    %v1061 = vmul.f32 %v805, %v805
    %v1062 = vmul.f32 %v806, %v806
    %v1063 = vmul.f32 %v807, %v807
    %v1064 = vmul.f32 %v808, %v808
    %v1065 = vmul.f32 %v809, %v809
    %v1066 = vmul.f32 %v810, %v810
    %v1067 = vmul.f32 %v811, %v811
    %v1068 = vmul.f32 %v812, %v812
    %v1069 = vmul.f32 %v813, %v813
    %v1070 = vmul.f32 %v814, %v814
    %v1071 = vmul.f32 %v815, %v815
    %v1072 = vmul.f32 %v816, %v816
    %v1073 = vmul.f32 %v817, %v817
    %v1074 = vmul.f32 %v818, %v818
    %v1075 = vmul.f32 %v819, %v819
    %v1076 = vmul.f32 %v820, %v820
    %v1077 = vmul.f32 %v821, %v821
    %v1078 = vmul.f32 %v822, %v822
    %v1079 = vmul.f32 %v823, %v823
    %v1080 = vmul.f32 %v824, %v824
    %v1081 = vmul.f32 %v825, %v825
    %v1082 = vmul.f32 %v826, %v826
    %v1083 = vmul.f32 %v827, %v827
    %v1084 = vmul.f32 %v828, %v828
    %v1085 = vmul.f32 %v829, %v829
    %v1086 = vmul.f32 %v830, %v830
    %v1087 = vmul.f32 %v831, %v831
    %v1088 = vmul.f32 %v832, %v832
    %v1089 = vmul.f32 %v833, %v833
    %v1090 = vmul.f32 %v834, %v834
    %v1091 = vmul.f32 %v835, %v835
    %v1092 = vmul.f32 %v836, %v836
    %v1093 = vmul.f32 %v837, %v837
    %p1094 = scmp.lt.s32.totalorder %s64, 0
    // Predicated region
    $region22: #{_mse_partial_pallas.1} parent=1 // pred_check
      %p1095 = pneg %p1094
    $region23: #{_mse_partial_pallas.1} parent=1 // pred_check_branch
      %1097 = sbr.rel (%p1095) target = $region25
    $region24: #{_mse_partial_pallas.1} parent=1 // pred_region
      %v1098 = vld [vmem:[#allocation2] sm:$0xff]
      %v1099 = vadd.f32 %v838, %v839
      %v1100 = vadd.f32 %v1099, %v840
      %v1101 = vadd.f32 %v1100, %v841
      %v1102 = vadd.f32 %v1101, %v842
      %v1103 = vadd.f32 %v1102, %v843
      %v1104 = vadd.f32 %v1103, %v844
      %v1105 = vadd.f32 %v1104, %v845
      %v1106 = vadd.f32 %v1105, %v846
      %v1107 = vadd.f32 %v1106, %v847
      %v1108 = vadd.f32 %v1107, %v848
      %v1109 = vadd.f32 %v1108, %v849
      %v1110 = vadd.f32 %v1109, %v850
      %v1111 = vadd.f32 %v1110, %v851
      %v1112 = vadd.f32 %v1111, %v852
      %v1113 = vadd.f32 %v1112, %v853
      %v1114 = vadd.f32 %v1113, %v854
      %v1115 = vadd.f32 %v1114, %v855
      %v1116 = vadd.f32 %v1115, %v856
      %v1117 = vadd.f32 %v1116, %v857
      %v1118 = vadd.f32 %v1117, %v858
      %v1119 = vadd.f32 %v1118, %v859
      %v1120 = vadd.f32 %v1119, %v860
      %v1121 = vadd.f32 %v1120, %v861
      %v1122 = vadd.f32 %v1121, %v862
      %v1123 = vadd.f32 %v1122, %v863
      %v1124 = vadd.f32 %v1123, %v864
      %v1125 = vadd.f32 %v1124, %v865
      %v1126 = vadd.f32 %v1125, %v866
      %v1127 = vadd.f32 %v1126, %v867
      %v1128 = vadd.f32 %v1127, %v868
      %v1129 = vadd.f32 %v1128, %v869
      %v1130 = vadd.f32 %v1129, %v870
      %v1131 = vadd.f32 %v1130, %v871
      %v1132 = vadd.f32 %v1131, %v872
      %v1133 = vadd.f32 %v1132, %v873
      %v1134 = vadd.f32 %v1133, %v874
      %v1135 = vadd.f32 %v1134, %v875
      %v1136 = vadd.f32 %v1135, %v876
      %v1137 = vadd.f32 %v1136, %v877
      %v1138 = vadd.f32 %v1137, %v878
      %v1139 = vadd.f32 %v1138, %v879
      %v1140 = vadd.f32 %v1139, %v880
      %v1141 = vadd.f32 %v1140, %v881
      %v1142 = vadd.f32 %v1141, %v882
      %v1143 = vadd.f32 %v1142, %v883
      %v1144 = vadd.f32 %v1143, %v884
      %v1145 = vadd.f32 %v1144, %v885
      %v1146 = vadd.f32 %v1145, %v886
      %v1147 = vadd.f32 %v1146, %v887
      %v1148 = vadd.f32 %v1147, %v888
      %v1149 = vadd.f32 %v1148, %v889
      %v1150 = vadd.f32 %v1149, %v890
      %v1151 = vadd.f32 %v1150, %v891
      %v1152 = vadd.f32 %v1151, %v892
      %v1153 = vadd.f32 %v1152, %v893
      %v1154 = vadd.f32 %v1153, %v894
      %v1155 = vadd.f32 %v1154, %v895
      %v1156 = vadd.f32 %v1155, %v896
      %v1157 = vadd.f32 %v1156, %v897
      %v1158 = vadd.f32 %v1157, %v898
      %v1159 = vadd.f32 %v1158, %v899
      %v1160 = vadd.f32 %v1159, %v900
      %v1161 = vadd.f32 %v1160, %v901
      %v1162 = vadd.f32 %v1161, %v902
      %v1163 = vadd.f32 %v1162, %v903
      %v1164 = vadd.f32 %v1163, %v904
      %v1165 = vadd.f32 %v1164, %v905
      %v1166 = vadd.f32 %v1165, %v906
      %v1167 = vadd.f32 %v1166, %v907
      %v1168 = vadd.f32 %v1167, %v908
      %v1169 = vadd.f32 %v1168, %v909
      %v1170 = vadd.f32 %v1169, %v910
      %v1171 = vadd.f32 %v1170, %v911
      %v1172 = vadd.f32 %v1171, %v912
      %v1173 = vadd.f32 %v1172, %v913
      %v1174 = vadd.f32 %v1173, %v914
      %v1175 = vadd.f32 %v1174, %v915
      %v1176 = vadd.f32 %v1175, %v916
      %v1177 = vadd.f32 %v1176, %v917
      %v1178 = vadd.f32 %v1177, %v918
      %v1179 = vadd.f32 %v1178, %v919
      %v1180 = vadd.f32 %v1179, %v920
      %v1181 = vadd.f32 %v1180, %v921
      %v1182 = vadd.f32 %v1181, %v922
      %v1183 = vadd.f32 %v1182, %v923
      %v1184 = vadd.f32 %v1183, %v924
      %v1185 = vadd.f32 %v1184, %v925
      %v1186 = vadd.f32 %v1185, %v926
      %v1187 = vadd.f32 %v1186, %v927
      %v1188 = vadd.f32 %v1187, %v928
      %v1189 = vadd.f32 %v1188, %v929
      %v1190 = vadd.f32 %v1189, %v930
      %v1191 = vadd.f32 %v1190, %v931
      %v1192 = vadd.f32 %v1191, %v932
      %v1193 = vadd.f32 %v1192, %v933
      %v1194 = vadd.f32 %v1193, %v934
      %v1195 = vadd.f32 %v1194, %v935
      %v1196 = vadd.f32 %v1195, %v936
      %v1197 = vadd.f32 %v1196, %v937
      %v1198 = vadd.f32 %v1197, %v938
      %v1199 = vadd.f32 %v1198, %v939
      %v1200 = vadd.f32 %v1199, %v940
      %v1201 = vadd.f32 %v1200, %v941
      %v1202 = vadd.f32 %v1201, %v942
      %v1203 = vadd.f32 %v1202, %v943
      %v1204 = vadd.f32 %v1203, %v944
      %v1205 = vadd.f32 %v1204, %v945
      %v1206 = vadd.f32 %v1205, %v946
      %v1207 = vadd.f32 %v1206, %v947
      %v1208 = vadd.f32 %v1207, %v948
      %v1209 = vadd.f32 %v1208, %v949
      %v1210 = vadd.f32 %v1209, %v950
      %v1211 = vadd.f32 %v1210, %v951
      %v1212 = vadd.f32 %v1211, %v952
      %v1213 = vadd.f32 %v1212, %v953
      %v1214 = vadd.f32 %v1213, %v954
      %v1215 = vadd.f32 %v1214, %v955
      %v1216 = vadd.f32 %v1215, %v956
      %v1217 = vadd.f32 %v1216, %v957
      %v1218 = vadd.f32 %v1217, %v958
      %v1219 = vadd.f32 %v1218, %v959
      %v1220 = vadd.f32 %v1219, %v960
      %v1221 = vadd.f32 %v1220, %v961
      %v1222 = vadd.f32 %v1221, %v962
      %v1223 = vadd.f32 %v1222, %v963
      %v1224 = vadd.f32 %v1223, %v964
      %v1225 = vadd.f32 %v1224, %v965
      %v1226 = vadd.f32 %v1225, %v966
      %v1227 = vadd.f32 %v1226, %v967
      %v1228 = vadd.f32 %v1227, %v968
      %v1229 = vadd.f32 %v1228, %v969
      %v1230 = vadd.f32 %v1229, %v970
      %v1231 = vadd.f32 %v1230, %v971
      %v1232 = vadd.f32 %v1231, %v972
      %v1233 = vadd.f32 %v1232, %v973
      %v1234 = vadd.f32 %v1233, %v974
      %v1235 = vadd.f32 %v1234, %v975
      %v1236 = vadd.f32 %v1235, %v976
      %v1237 = vadd.f32 %v1236, %v977
      %v1238 = vadd.f32 %v1237, %v978
      %v1239 = vadd.f32 %v1238, %v979
      %v1240 = vadd.f32 %v1239, %v980
      %v1241 = vadd.f32 %v1240, %v981
      %v1242 = vadd.f32 %v1241, %v982
      %v1243 = vadd.f32 %v1242, %v983
      %v1244 = vadd.f32 %v1243, %v984
      %v1245 = vadd.f32 %v1244, %v985
      %v1246 = vadd.f32 %v1245, %v986
      %v1247 = vadd.f32 %v1246, %v987
      %v1248 = vadd.f32 %v1247, %v988
      %v1249 = vadd.f32 %v1248, %v989
      %v1250 = vadd.f32 %v1249, %v990
      %v1251 = vadd.f32 %v1250, %v991
      %v1252 = vadd.f32 %v1251, %v992
      %v1253 = vadd.f32 %v1252, %v993
      %v1254 = vadd.f32 %v1253, %v994
      %v1255 = vadd.f32 %v1254, %v995
      %v1256 = vadd.f32 %v1255, %v996
      %v1257 = vadd.f32 %v1256, %v997
      %v1258 = vadd.f32 %v1257, %v998
      %v1259 = vadd.f32 %v1258, %v999
      %v1260 = vadd.f32 %v1259, %v1000
      %v1261 = vadd.f32 %v1260, %v1001
      %v1262 = vadd.f32 %v1261, %v1002
      %v1263 = vadd.f32 %v1262, %v1003
      %v1264 = vadd.f32 %v1263, %v1004
      %v1265 = vadd.f32 %v1264, %v1005
      %v1266 = vadd.f32 %v1265, %v1006
      %v1267 = vadd.f32 %v1266, %v1007
      %v1268 = vadd.f32 %v1267, %v1008
      %v1269 = vadd.f32 %v1268, %v1009
      %v1270 = vadd.f32 %v1269, %v1010
      %v1271 = vadd.f32 %v1270, %v1011
      %v1272 = vadd.f32 %v1271, %v1012
      %v1273 = vadd.f32 %v1272, %v1013
      %v1274 = vadd.f32 %v1273, %v1014
      %v1275 = vadd.f32 %v1274, %v1015
      %v1276 = vadd.f32 %v1275, %v1016
      %v1277 = vadd.f32 %v1276, %v1017
      %v1278 = vadd.f32 %v1277, %v1018
      %v1279 = vadd.f32 %v1278, %v1019
      %v1280 = vadd.f32 %v1279, %v1020
      %v1281 = vadd.f32 %v1280, %v1021
      %v1282 = vadd.f32 %v1281, %v1022
      %v1283 = vadd.f32 %v1282, %v1023
      %v1284 = vadd.f32 %v1283, %v1024
      %v1285 = vadd.f32 %v1284, %v1025
      %v1286 = vadd.f32 %v1285, %v1026
      %v1287 = vadd.f32 %v1286, %v1027
      %v1288 = vadd.f32 %v1287, %v1028
      %v1289 = vadd.f32 %v1288, %v1029
      %v1290 = vadd.f32 %v1289, %v1030
      %v1291 = vadd.f32 %v1290, %v1031
      %v1292 = vadd.f32 %v1291, %v1032
      %v1293 = vadd.f32 %v1292, %v1033
      %v1294 = vadd.f32 %v1293, %v1034
      %v1295 = vadd.f32 %v1294, %v1035
      %v1296 = vadd.f32 %v1295, %v1036
      %v1297 = vadd.f32 %v1296, %v1037
      %v1298 = vadd.f32 %v1297, %v1038
      %v1299 = vadd.f32 %v1298, %v1039
      %v1300 = vadd.f32 %v1299, %v1040
      %v1301 = vadd.f32 %v1300, %v1041
      %v1302 = vadd.f32 %v1301, %v1042
      %v1303 = vadd.f32 %v1302, %v1043
      %v1304 = vadd.f32 %v1303, %v1044
      %v1305 = vadd.f32 %v1304, %v1045
      %v1306 = vadd.f32 %v1305, %v1046
      %v1307 = vadd.f32 %v1306, %v1047
      %v1308 = vadd.f32 %v1307, %v1048
      %v1309 = vadd.f32 %v1308, %v1049
      %v1310 = vadd.f32 %v1309, %v1050
      %v1311 = vadd.f32 %v1310, %v1051
      %v1312 = vadd.f32 %v1311, %v1052
      %v1313 = vadd.f32 %v1312, %v1053
      %v1314 = vadd.f32 %v1313, %v1054
      %v1315 = vadd.f32 %v1314, %v1055
      %v1316 = vadd.f32 %v1315, %v1056
      %v1317 = vadd.f32 %v1316, %v1057
      %v1318 = vadd.f32 %v1317, %v1058
      %v1319 = vadd.f32 %v1318, %v1059
      %v1320 = vadd.f32 %v1319, %v1060
      %v1321 = vadd.f32 %v1320, %v1061
      %v1322 = vadd.f32 %v1321, %v1062
      %v1323 = vadd.f32 %v1322, %v1063
      %v1324 = vadd.f32 %v1323, %v1064
      %v1325 = vadd.f32 %v1324, %v1065
      %v1326 = vadd.f32 %v1325, %v1066
      %v1327 = vadd.f32 %v1326, %v1067
      %v1328 = vadd.f32 %v1327, %v1068
      %v1329 = vadd.f32 %v1328, %v1069
      %v1330 = vadd.f32 %v1329, %v1070
      %v1331 = vadd.f32 %v1330, %v1071
      %v1332 = vadd.f32 %v1331, %v1072
      %v1333 = vadd.f32 %v1332, %v1073
      %v1334 = vadd.f32 %v1333, %v1074
      %v1335 = vadd.f32 %v1334, %v1075
      %v1336 = vadd.f32 %v1335, %v1076
      %v1337 = vadd.f32 %v1336, %v1077
      %v1338 = vadd.f32 %v1337, %v1078
      %v1339 = vadd.f32 %v1338, %v1079
      %v1340 = vadd.f32 %v1339, %v1080
      %v1341 = vadd.f32 %v1340, %v1081
      %v1342 = vadd.f32 %v1341, %v1082
      %v1343 = vadd.f32 %v1342, %v1083
      %v1344 = vadd.f32 %v1343, %v1084
      %v1345 = vadd.f32 %v1344, %v1085
      %v1346 = vadd.f32 %v1345, %v1086
      %v1347 = vadd.f32 %v1346, %v1087
      %v1348 = vadd.f32 %v1347, %v1088
      %v1349 = vadd.f32 %v1348, %v1089
      %v1350 = vadd.f32 %v1349, %v1090
      %v1351 = vadd.f32 %v1350, %v1091
      %v1352 = vadd.f32 %v1351, %v1092
      %v1353 = vadd.f32 %v1352, %v1093
      %v1354 = vadd.f32 %v1098, %v1353
      %1355 = vst [vmem:[#allocation2] sm:$0xff] %v1354
    $region25: #{_mse_partial_pallas.1} parent=1 // pred_fallthru
      _
    %p1356 = scmp.ge.s32.totalorder %s64, 0
    // Predicated region
    $region26: #{_mse_partial_pallas.1} parent=1 // pred_check
      %p1357 = pneg %p1356
    $region27: #{_mse_partial_pallas.1} parent=1 // pred_check_branch
      %1359 = sbr.rel (%p1357) target = $region29
    $region28: #{_mse_partial_pallas.1} parent=1 // pred_region
      %p1360 = scmp.lt.s32.totalorder %s64, 0
      %s1361 = scalar_select %p1360, %s64, 0
      %s1362 = smul.u32 %s1361, 2048
      %v1363 = vlaneseq
      %v1364 = vshrl.u32 %v1363, 7
      %v1365 = vadd.s32 %v1364, 8
      %v1366 = vadd.s32 %v1364, 16
      %v1367 = vadd.s32 %v1364, 24
      %v1368 = vadd.s32 %v1364, 32
      %v1369 = vadd.s32 %v1364, 40
      %v1370 = vadd.s32 %v1364, 48
      %v1371 = vadd.s32 %v1364, 56
      %v1372 = vadd.s32 %v1364, 64
      %v1373 = vadd.s32 %v1364, 72
      %v1374 = vadd.s32 %v1364, 80
      %v1375 = vadd.s32 %v1364, 88
      %v1376 = vadd.s32 %v1364, 96
      %v1377 = vadd.s32 %v1364, 104
      %v1378 = vadd.s32 %v1364, 112
      %v1379 = vadd.s32 %v1364, 120
      %v1380 = vadd.s32 %v1364, 128
      %v1381 = vadd.s32 %v1364, 136
      %v1382 = vadd.s32 %v1364, 144
      %v1383 = vadd.s32 %v1364, 152
      %v1384 = vadd.s32 %v1364, 160
      %v1385 = vadd.s32 %v1364, 168
      %v1386 = vadd.s32 %v1364, 176
      %v1387 = vadd.s32 %v1364, 184
      %v1388 = vadd.s32 %v1364, 192
      %v1389 = vadd.s32 %v1364, 200
      %v1390 = vadd.s32 %v1364, 208
      %v1391 = vadd.s32 %v1364, 216
      %v1392 = vadd.s32 %v1364, 224
      %v1393 = vadd.s32 %v1364, 232
      %v1394 = vadd.s32 %v1364, 240
      %v1395 = vadd.s32 %v1364, 248
      %v1396 = vadd.s32 %v1364, 256
      %v1397 = vadd.s32 %v1364, 264
      %v1398 = vadd.s32 %v1364, 272
      %v1399 = vadd.s32 %v1364, 280
      %v1400 = vadd.s32 %v1364, 288
      %v1401 = vadd.s32 %v1364, 296
      %v1402 = vadd.s32 %v1364, 304
      %v1403 = vadd.s32 %v1364, 312
      %v1404 = vadd.s32 %v1364, 320
      %v1405 = vadd.s32 %v1364, 328
      %v1406 = vadd.s32 %v1364, 336
      %v1407 = vadd.s32 %v1364, 344
      %v1408 = vadd.s32 %v1364, 352
      %v1409 = vadd.s32 %v1364, 360
      %v1410 = vadd.s32 %v1364, 368
      %v1411 = vadd.s32 %v1364, 376
      %v1412 = vadd.s32 %v1364, 384
      %v1413 = vadd.s32 %v1364, 392
      %v1414 = vadd.s32 %v1364, 400
      %v1415 = vadd.s32 %v1364, 408
      %v1416 = vadd.s32 %v1364, 416
      %v1417 = vadd.s32 %v1364, 424
      %v1418 = vadd.s32 %v1364, 432
      %v1419 = vadd.s32 %v1364, 440
      %v1420 = vadd.s32 %v1364, 448
      %v1421 = vadd.s32 %v1364, 456
      %v1422 = vadd.s32 %v1364, 464
      %v1423 = vadd.s32 %v1364, 472
      %v1424 = vadd.s32 %v1364, 480
      %v1425 = vadd.s32 %v1364, 488
      %v1426 = vadd.s32 %v1364, 496
      %v1427 = vadd.s32 %v1364, 504
      %v1428 = vadd.s32 %v1364, 512
      %v1429 = vadd.s32 %v1364, 520
      %v1430 = vadd.s32 %v1364, 528
      %v1431 = vadd.s32 %v1364, 536
      %v1432 = vadd.s32 %v1364, 544
      %v1433 = vadd.s32 %v1364, 552
      %v1434 = vadd.s32 %v1364, 560
      %v1435 = vadd.s32 %v1364, 568
      %v1436 = vadd.s32 %v1364, 576
      %v1437 = vadd.s32 %v1364, 584
      %v1438 = vadd.s32 %v1364, 592
      %v1439 = vadd.s32 %v1364, 600
      %v1440 = vadd.s32 %v1364, 608
      %v1441 = vadd.s32 %v1364, 616
      %v1442 = vadd.s32 %v1364, 624
      %v1443 = vadd.s32 %v1364, 632
      %v1444 = vadd.s32 %v1364, 640
      %v1445 = vadd.s32 %v1364, 648
      %v1446 = vadd.s32 %v1364, 656
      %v1447 = vadd.s32 %v1364, 664
      %v1448 = vadd.s32 %v1364, 672
      %v1449 = vadd.s32 %v1364, 680
      %v1450 = vadd.s32 %v1364, 688
      %v1451 = vadd.s32 %v1364, 696
      %v1452 = vadd.s32 %v1364, 704
      %v1453 = vadd.s32 %v1364, 712
      %v1454 = vadd.s32 %v1364, 720
      %v1455 = vadd.s32 %v1364, 728
      %v1456 = vadd.s32 %v1364, 736
      %v1457 = vadd.s32 %v1364, 744
      %v1458 = vadd.s32 %v1364, 752
      %v1459 = vadd.s32 %v1364, 760
      %v1460 = vadd.s32 %v1364, 768
      %v1461 = vadd.s32 %v1364, 776
      %v1462 = vadd.s32 %v1364, 784
      %v1463 = vadd.s32 %v1364, 792
      %v1464 = vadd.s32 %v1364, 800
      %v1465 = vadd.s32 %v1364, 808
      %v1466 = vadd.s32 %v1364, 816
      %v1467 = vadd.s32 %v1364, 824
      %v1468 = vadd.s32 %v1364, 832
      %v1469 = vadd.s32 %v1364, 840
      %v1470 = vadd.s32 %v1364, 848
      %v1471 = vadd.s32 %v1364, 856
      %v1472 = vadd.s32 %v1364, 864
      %v1473 = vadd.s32 %v1364, 872
      %v1474 = vadd.s32 %v1364, 880
      %v1475 = vadd.s32 %v1364, 888
      %v1476 = vadd.s32 %v1364, 896
      %v1477 = vadd.s32 %v1364, 904
      %v1478 = vadd.s32 %v1364, 912
      %v1479 = vadd.s32 %v1364, 920
      %v1480 = vadd.s32 %v1364, 928
      %v1481 = vadd.s32 %v1364, 936
      %v1482 = vadd.s32 %v1364, 944
      %v1483 = vadd.s32 %v1364, 952
      %v1484 = vadd.s32 %v1364, 960
      %v1485 = vadd.s32 %v1364, 968
      %v1486 = vadd.s32 %v1364, 976
      %v1487 = vadd.s32 %v1364, 984
      %v1488 = vadd.s32 %v1364, 992
      %v1489 = vadd.s32 %v1364, 1000
      %v1490 = vadd.s32 %v1364, 1008
      %v1491 = vadd.s32 %v1364, 1016
      %v1492 = vadd.s32 %v1364, 1024
      %v1493 = vadd.s32 %v1364, 1032
      %v1494 = vadd.s32 %v1364, 1040
      %v1495 = vadd.s32 %v1364, 1048
      %v1496 = vadd.s32 %v1364, 1056
      %v1497 = vadd.s32 %v1364, 1064
      %v1498 = vadd.s32 %v1364, 1072
      %v1499 = vadd.s32 %v1364, 1080
      %v1500 = vadd.s32 %v1364, 1088
      %v1501 = vadd.s32 %v1364, 1096
      %v1502 = vadd.s32 %v1364, 1104
      %v1503 = vadd.s32 %v1364, 1112
      %v1504 = vadd.s32 %v1364, 1120
      %v1505 = vadd.s32 %v1364, 1128
      %v1506 = vadd.s32 %v1364, 1136
      %v1507 = vadd.s32 %v1364, 1144
      %v1508 = vadd.s32 %v1364, 1152
      %v1509 = vadd.s32 %v1364, 1160
      %v1510 = vadd.s32 %v1364, 1168
      %v1511 = vadd.s32 %v1364, 1176
      %v1512 = vadd.s32 %v1364, 1184
      %v1513 = vadd.s32 %v1364, 1192
      %v1514 = vadd.s32 %v1364, 1200
      %v1515 = vadd.s32 %v1364, 1208
      %v1516 = vadd.s32 %v1364, 1216
      %v1517 = vadd.s32 %v1364, 1224
      %v1518 = vadd.s32 %v1364, 1232
      %v1519 = vadd.s32 %v1364, 1240
      %v1520 = vadd.s32 %v1364, 1248
      %v1521 = vadd.s32 %v1364, 1256
      %v1522 = vadd.s32 %v1364, 1264
      %v1523 = vadd.s32 %v1364, 1272
      %v1524 = vadd.s32 %v1364, 1280
      %v1525 = vadd.s32 %v1364, 1288
      %v1526 = vadd.s32 %v1364, 1296
      %v1527 = vadd.s32 %v1364, 1304
      %v1528 = vadd.s32 %v1364, 1312
      %v1529 = vadd.s32 %v1364, 1320
      %v1530 = vadd.s32 %v1364, 1328
      %v1531 = vadd.s32 %v1364, 1336
      %v1532 = vadd.s32 %v1364, 1344
      %v1533 = vadd.s32 %v1364, 1352
      %v1534 = vadd.s32 %v1364, 1360
      %v1535 = vadd.s32 %v1364, 1368
      %v1536 = vadd.s32 %v1364, 1376
      %v1537 = vadd.s32 %v1364, 1384
      %v1538 = vadd.s32 %v1364, 1392
      %v1539 = vadd.s32 %v1364, 1400
      %v1540 = vadd.s32 %v1364, 1408
      %v1541 = vadd.s32 %v1364, 1416
      %v1542 = vadd.s32 %v1364, 1424
      %v1543 = vadd.s32 %v1364, 1432
      %v1544 = vadd.s32 %v1364, 1440
      %v1545 = vadd.s32 %v1364, 1448
      %v1546 = vadd.s32 %v1364, 1456
      %v1547 = vadd.s32 %v1364, 1464
      %v1548 = vadd.s32 %v1364, 1472
      %v1549 = vadd.s32 %v1364, 1480
      %v1550 = vadd.s32 %v1364, 1488
      %v1551 = vadd.s32 %v1364, 1496
      %v1552 = vadd.s32 %v1364, 1504
      %v1553 = vadd.s32 %v1364, 1512
      %v1554 = vadd.s32 %v1364, 1520
      %v1555 = vadd.s32 %v1364, 1528
      %v1556 = vadd.s32 %v1364, 1536
      %v1557 = vadd.s32 %v1364, 1544
      %v1558 = vadd.s32 %v1364, 1552
      %v1559 = vadd.s32 %v1364, 1560
      %v1560 = vadd.s32 %v1364, 1568
      %v1561 = vadd.s32 %v1364, 1576
      %v1562 = vadd.s32 %v1364, 1584
      %v1563 = vadd.s32 %v1364, 1592
      %v1564 = vadd.s32 %v1364, 1600
      %v1565 = vadd.s32 %v1364, 1608
      %v1566 = vadd.s32 %v1364, 1616
      %v1567 = vadd.s32 %v1364, 1624
      %v1568 = vadd.s32 %v1364, 1632
      %v1569 = vadd.s32 %v1364, 1640
      %v1570 = vadd.s32 %v1364, 1648
      %v1571 = vadd.s32 %v1364, 1656
      %v1572 = vadd.s32 %v1364, 1664
      %v1573 = vadd.s32 %v1364, 1672
      %v1574 = vadd.s32 %v1364, 1680
      %v1575 = vadd.s32 %v1364, 1688
      %v1576 = vadd.s32 %v1364, 1696
      %v1577 = vadd.s32 %v1364, 1704
      %v1578 = vadd.s32 %v1364, 1712
      %v1579 = vadd.s32 %v1364, 1720
      %v1580 = vadd.s32 %v1364, 1728
      %v1581 = vadd.s32 %v1364, 1736
      %v1582 = vadd.s32 %v1364, 1744
      %v1583 = vadd.s32 %v1364, 1752
      %v1584 = vadd.s32 %v1364, 1760
      %v1585 = vadd.s32 %v1364, 1768
      %v1586 = vadd.s32 %v1364, 1776
      %v1587 = vadd.s32 %v1364, 1784
      %v1588 = vadd.s32 %v1364, 1792
      %v1589 = vadd.s32 %v1364, 1800
      %v1590 = vadd.s32 %v1364, 1808
      %v1591 = vadd.s32 %v1364, 1816
      %v1592 = vadd.s32 %v1364, 1824
      %v1593 = vadd.s32 %v1364, 1832
      %v1594 = vadd.s32 %v1364, 1840
      %v1595 = vadd.s32 %v1364, 1848
      %v1596 = vadd.s32 %v1364, 1856
      %v1597 = vadd.s32 %v1364, 1864
      %v1598 = vadd.s32 %v1364, 1872
      %v1599 = vadd.s32 %v1364, 1880
      %v1600 = vadd.s32 %v1364, 1888
      %v1601 = vadd.s32 %v1364, 1896
      %v1602 = vadd.s32 %v1364, 1904
      %v1603 = vadd.s32 %v1364, 1912
      %v1604 = vadd.s32 %v1364, 1920
      %v1605 = vadd.s32 %v1364, 1928
      %v1606 = vadd.s32 %v1364, 1936
      %v1607 = vadd.s32 %v1364, 1944
      %v1608 = vadd.s32 %v1364, 1952
      %v1609 = vadd.s32 %v1364, 1960
      %v1610 = vadd.s32 %v1364, 1968
      %v1611 = vadd.s32 %v1364, 1976
      %v1612 = vadd.s32 %v1364, 1984
      %v1613 = vadd.s32 %v1364, 1992
      %v1614 = vadd.s32 %v1364, 2000
      %v1615 = vadd.s32 %v1364, 2008
      %v1616 = vadd.s32 %v1364, 2016
      %v1617 = vadd.s32 %v1364, 2024
      %v1618 = vadd.s32 %v1364, 2032
      %v1619 = vadd.s32 %v1364, 2040
      %v1620 = vstv %s1362
      %v1621 = vadd.s32 %v1620, %v1364
      %v1622 = vadd.s32 %v1620, %v1365
      %v1623 = vadd.s32 %v1620, %v1366
      %v1624 = vadd.s32 %v1620, %v1367
      %v1625 = vadd.s32 %v1620, %v1368
      %v1626 = vadd.s32 %v1620, %v1369
      %v1627 = vadd.s32 %v1620, %v1370
      %v1628 = vadd.s32 %v1620, %v1371
      %v1629 = vadd.s32 %v1620, %v1372
      %v1630 = vadd.s32 %v1620, %v1373
      %v1631 = vadd.s32 %v1620, %v1374
      %v1632 = vadd.s32 %v1620, %v1375
      %v1633 = vadd.s32 %v1620, %v1376
      %v1634 = vadd.s32 %v1620, %v1377
      %v1635 = vadd.s32 %v1620, %v1378
      %v1636 = vadd.s32 %v1620, %v1379
      %v1637 = vadd.s32 %v1620, %v1380
      %v1638 = vadd.s32 %v1620, %v1381
      %v1639 = vadd.s32 %v1620, %v1382
      %v1640 = vadd.s32 %v1620, %v1383
      %v1641 = vadd.s32 %v1620, %v1384
      %v1642 = vadd.s32 %v1620, %v1385
      %v1643 = vadd.s32 %v1620, %v1386
      %v1644 = vadd.s32 %v1620, %v1387
      %v1645 = vadd.s32 %v1620, %v1388
      %v1646 = vadd.s32 %v1620, %v1389
      %v1647 = vadd.s32 %v1620, %v1390
      %v1648 = vadd.s32 %v1620, %v1391
      %v1649 = vadd.s32 %v1620, %v1392
      %v1650 = vadd.s32 %v1620, %v1393
      %v1651 = vadd.s32 %v1620, %v1394
      %v1652 = vadd.s32 %v1620, %v1395
      %v1653 = vadd.s32 %v1620, %v1396
      %v1654 = vadd.s32 %v1620, %v1397
      %v1655 = vadd.s32 %v1620, %v1398
      %v1656 = vadd.s32 %v1620, %v1399
      %v1657 = vadd.s32 %v1620, %v1400
      %v1658 = vadd.s32 %v1620, %v1401
      %v1659 = vadd.s32 %v1620, %v1402
      %v1660 = vadd.s32 %v1620, %v1403
      %v1661 = vadd.s32 %v1620, %v1404
      %v1662 = vadd.s32 %v1620, %v1405
      %v1663 = vadd.s32 %v1620, %v1406
      %v1664 = vadd.s32 %v1620, %v1407
      %v1665 = vadd.s32 %v1620, %v1408
      %v1666 = vadd.s32 %v1620, %v1409
      %v1667 = vadd.s32 %v1620, %v1410
      %v1668 = vadd.s32 %v1620, %v1411
      %v1669 = vadd.s32 %v1620, %v1412
      %v1670 = vadd.s32 %v1620, %v1413
      %v1671 = vadd.s32 %v1620, %v1414
      %v1672 = vadd.s32 %v1620, %v1415
      %v1673 = vadd.s32 %v1620, %v1416
      %v1674 = vadd.s32 %v1620, %v1417
      %v1675 = vadd.s32 %v1620, %v1418
      %v1676 = vadd.s32 %v1620, %v1419
      %v1677 = vadd.s32 %v1620, %v1420
      %v1678 = vadd.s32 %v1620, %v1421
      %v1679 = vadd.s32 %v1620, %v1422
      %v1680 = vadd.s32 %v1620, %v1423
      %v1681 = vadd.s32 %v1620, %v1424
      %v1682 = vadd.s32 %v1620, %v1425
      %v1683 = vadd.s32 %v1620, %v1426
      %v1684 = vadd.s32 %v1620, %v1427
      %v1685 = vadd.s32 %v1620, %v1428
      %v1686 = vadd.s32 %v1620, %v1429
      %v1687 = vadd.s32 %v1620, %v1430
      %v1688 = vadd.s32 %v1620, %v1431
      %v1689 = vadd.s32 %v1620, %v1432
      %v1690 = vadd.s32 %v1620, %v1433
      %v1691 = vadd.s32 %v1620, %v1434
      %v1692 = vadd.s32 %v1620, %v1435
      %v1693 = vadd.s32 %v1620, %v1436
      %v1694 = vadd.s32 %v1620, %v1437
      %v1695 = vadd.s32 %v1620, %v1438
      %v1696 = vadd.s32 %v1620, %v1439
      %v1697 = vadd.s32 %v1620, %v1440
      %v1698 = vadd.s32 %v1620, %v1441
      %v1699 = vadd.s32 %v1620, %v1442
      %v1700 = vadd.s32 %v1620, %v1443
      %v1701 = vadd.s32 %v1620, %v1444
      %v1702 = vadd.s32 %v1620, %v1445
      %v1703 = vadd.s32 %v1620, %v1446
      %v1704 = vadd.s32 %v1620, %v1447
      %v1705 = vadd.s32 %v1620, %v1448
      %v1706 = vadd.s32 %v1620, %v1449
      %v1707 = vadd.s32 %v1620, %v1450
      %v1708 = vadd.s32 %v1620, %v1451
      %v1709 = vadd.s32 %v1620, %v1452
      %v1710 = vadd.s32 %v1620, %v1453
      %v1711 = vadd.s32 %v1620, %v1454
      %v1712 = vadd.s32 %v1620, %v1455
      %v1713 = vadd.s32 %v1620, %v1456
      %v1714 = vadd.s32 %v1620, %v1457
      %v1715 = vadd.s32 %v1620, %v1458
      %v1716 = vadd.s32 %v1620, %v1459
      %v1717 = vadd.s32 %v1620, %v1460
      %v1718 = vadd.s32 %v1620, %v1461
      %v1719 = vadd.s32 %v1620, %v1462
      %v1720 = vadd.s32 %v1620, %v1463
      %v1721 = vadd.s32 %v1620, %v1464
      %v1722 = vadd.s32 %v1620, %v1465
      %v1723 = vadd.s32 %v1620, %v1466
      %v1724 = vadd.s32 %v1620, %v1467
      %v1725 = vadd.s32 %v1620, %v1468
      %v1726 = vadd.s32 %v1620, %v1469
      %v1727 = vadd.s32 %v1620, %v1470
      %v1728 = vadd.s32 %v1620, %v1471
      %v1729 = vadd.s32 %v1620, %v1472
      %v1730 = vadd.s32 %v1620, %v1473
      %v1731 = vadd.s32 %v1620, %v1474
      %v1732 = vadd.s32 %v1620, %v1475
      %v1733 = vadd.s32 %v1620, %v1476
      %v1734 = vadd.s32 %v1620, %v1477
      %v1735 = vadd.s32 %v1620, %v1478
      %v1736 = vadd.s32 %v1620, %v1479
      %v1737 = vadd.s32 %v1620, %v1480
      %v1738 = vadd.s32 %v1620, %v1481
      %v1739 = vadd.s32 %v1620, %v1482
      %v1740 = vadd.s32 %v1620, %v1483
      %v1741 = vadd.s32 %v1620, %v1484
      %v1742 = vadd.s32 %v1620, %v1485
      %v1743 = vadd.s32 %v1620, %v1486
      %v1744 = vadd.s32 %v1620, %v1487
      %v1745 = vadd.s32 %v1620, %v1488
      %v1746 = vadd.s32 %v1620, %v1489
      %v1747 = vadd.s32 %v1620, %v1490
      %v1748 = vadd.s32 %v1620, %v1491
      %v1749 = vadd.s32 %v1620, %v1492
      %v1750 = vadd.s32 %v1620, %v1493
      %v1751 = vadd.s32 %v1620, %v1494
      %v1752 = vadd.s32 %v1620, %v1495
      %v1753 = vadd.s32 %v1620, %v1496
      %v1754 = vadd.s32 %v1620, %v1497
      %v1755 = vadd.s32 %v1620, %v1498
      %v1756 = vadd.s32 %v1620, %v1499
      %v1757 = vadd.s32 %v1620, %v1500
      %v1758 = vadd.s32 %v1620, %v1501
      %v1759 = vadd.s32 %v1620, %v1502
      %v1760 = vadd.s32 %v1620, %v1503
      %v1761 = vadd.s32 %v1620, %v1504
      %v1762 = vadd.s32 %v1620, %v1505
      %v1763 = vadd.s32 %v1620, %v1506
      %v1764 = vadd.s32 %v1620, %v1507
      %v1765 = vadd.s32 %v1620, %v1508
      %v1766 = vadd.s32 %v1620, %v1509
      %v1767 = vadd.s32 %v1620, %v1510
      %v1768 = vadd.s32 %v1620, %v1511
      %v1769 = vadd.s32 %v1620, %v1512
      %v1770 = vadd.s32 %v1620, %v1513
      %v1771 = vadd.s32 %v1620, %v1514
      %v1772 = vadd.s32 %v1620, %v1515
      %v1773 = vadd.s32 %v1620, %v1516
      %v1774 = vadd.s32 %v1620, %v1517
      %v1775 = vadd.s32 %v1620, %v1518
      %v1776 = vadd.s32 %v1620, %v1519
      %v1777 = vadd.s32 %v1620, %v1520
      %v1778 = vadd.s32 %v1620, %v1521
      %v1779 = vadd.s32 %v1620, %v1522
      %v1780 = vadd.s32 %v1620, %v1523
      %v1781 = vadd.s32 %v1620, %v1524
      %v1782 = vadd.s32 %v1620, %v1525
      %v1783 = vadd.s32 %v1620, %v1526
      %v1784 = vadd.s32 %v1620, %v1527
      %v1785 = vadd.s32 %v1620, %v1528
      %v1786 = vadd.s32 %v1620, %v1529
      %v1787 = vadd.s32 %v1620, %v1530
      %v1788 = vadd.s32 %v1620, %v1531
      %v1789 = vadd.s32 %v1620, %v1532
      %v1790 = vadd.s32 %v1620, %v1533
      %v1791 = vadd.s32 %v1620, %v1534
      %v1792 = vadd.s32 %v1620, %v1535
      %v1793 = vadd.s32 %v1620, %v1536
      %v1794 = vadd.s32 %v1620, %v1537
      %v1795 = vadd.s32 %v1620, %v1538
      %v1796 = vadd.s32 %v1620, %v1539
      %v1797 = vadd.s32 %v1620, %v1540
      %v1798 = vadd.s32 %v1620, %v1541
      %v1799 = vadd.s32 %v1620, %v1542
      %v1800 = vadd.s32 %v1620, %v1543
      %v1801 = vadd.s32 %v1620, %v1544
      %v1802 = vadd.s32 %v1620, %v1545
      %v1803 = vadd.s32 %v1620, %v1546
      %v1804 = vadd.s32 %v1620, %v1547
      %v1805 = vadd.s32 %v1620, %v1548
      %v1806 = vadd.s32 %v1620, %v1549
      %v1807 = vadd.s32 %v1620, %v1550
      %v1808 = vadd.s32 %v1620, %v1551
      %v1809 = vadd.s32 %v1620, %v1552
      %v1810 = vadd.s32 %v1620, %v1553
      %v1811 = vadd.s32 %v1620, %v1554
      %v1812 = vadd.s32 %v1620, %v1555
      %v1813 = vadd.s32 %v1620, %v1556
      %v1814 = vadd.s32 %v1620, %v1557
      %v1815 = vadd.s32 %v1620, %v1558
      %v1816 = vadd.s32 %v1620, %v1559
      %v1817 = vadd.s32 %v1620, %v1560
      %v1818 = vadd.s32 %v1620, %v1561
      %v1819 = vadd.s32 %v1620, %v1562
      %v1820 = vadd.s32 %v1620, %v1563
      %v1821 = vadd.s32 %v1620, %v1564
      %v1822 = vadd.s32 %v1620, %v1565
      %v1823 = vadd.s32 %v1620, %v1566
      %v1824 = vadd.s32 %v1620, %v1567
      %v1825 = vadd.s32 %v1620, %v1568
      %v1826 = vadd.s32 %v1620, %v1569
      %v1827 = vadd.s32 %v1620, %v1570
      %v1828 = vadd.s32 %v1620, %v1571
      %v1829 = vadd.s32 %v1620, %v1572
      %v1830 = vadd.s32 %v1620, %v1573
      %v1831 = vadd.s32 %v1620, %v1574
      %v1832 = vadd.s32 %v1620, %v1575
      %v1833 = vadd.s32 %v1620, %v1576
      %v1834 = vadd.s32 %v1620, %v1577
      %v1835 = vadd.s32 %v1620, %v1578
      %v1836 = vadd.s32 %v1620, %v1579
      %v1837 = vadd.s32 %v1620, %v1580
      %v1838 = vadd.s32 %v1620, %v1581
      %v1839 = vadd.s32 %v1620, %v1582
      %v1840 = vadd.s32 %v1620, %v1583
      %v1841 = vadd.s32 %v1620, %v1584
      %v1842 = vadd.s32 %v1620, %v1585
      %v1843 = vadd.s32 %v1620, %v1586
      %v1844 = vadd.s32 %v1620, %v1587
      %v1845 = vadd.s32 %v1620, %v1588
      %v1846 = vadd.s32 %v1620, %v1589
      %v1847 = vadd.s32 %v1620, %v1590
      %v1848 = vadd.s32 %v1620, %v1591
      %v1849 = vadd.s32 %v1620, %v1592
      %v1850 = vadd.s32 %v1620, %v1593
      %v1851 = vadd.s32 %v1620, %v1594
      %v1852 = vadd.s32 %v1620, %v1595
      %v1853 = vadd.s32 %v1620, %v1596
      %v1854 = vadd.s32 %v1620, %v1597
      %v1855 = vadd.s32 %v1620, %v1598
      %v1856 = vadd.s32 %v1620, %v1599
      %v1857 = vadd.s32 %v1620, %v1600
      %v1858 = vadd.s32 %v1620, %v1601
      %v1859 = vadd.s32 %v1620, %v1602
      %v1860 = vadd.s32 %v1620, %v1603
      %v1861 = vadd.s32 %v1620, %v1604
      %v1862 = vadd.s32 %v1620, %v1605
      %v1863 = vadd.s32 %v1620, %v1606
      %v1864 = vadd.s32 %v1620, %v1607
      %v1865 = vadd.s32 %v1620, %v1608
      %v1866 = vadd.s32 %v1620, %v1609
      %v1867 = vadd.s32 %v1620, %v1610
      %v1868 = vadd.s32 %v1620, %v1611
      %v1869 = vadd.s32 %v1620, %v1612
      %v1870 = vadd.s32 %v1620, %v1613
      %v1871 = vadd.s32 %v1620, %v1614
      %v1872 = vadd.s32 %v1620, %v1615
      %v1873 = vadd.s32 %v1620, %v1616
      %v1874 = vadd.s32 %v1620, %v1617
      %v1875 = vadd.s32 %v1620, %v1618
      %v1876 = vadd.s32 %v1620, %v1619
      %p1877 = scmp.eq.s32.totalorder %s64, 0
      %s1878 = scalar_select %p1877, 2048, 4294967295
      %v1879 = vstv %s1878
      %vm1880 = vcmp.lt.s32.totalorder %v1621, %v1879
      %vm1881 = vcmp.lt.s32.totalorder %v1622, %v1879
      %vm1882 = vcmp.lt.s32.totalorder %v1623, %v1879
      %vm1883 = vcmp.lt.s32.totalorder %v1624, %v1879
      %vm1884 = vcmp.lt.s32.totalorder %v1625, %v1879
      %vm1885 = vcmp.lt.s32.totalorder %v1626, %v1879
      %vm1886 = vcmp.lt.s32.totalorder %v1627, %v1879
      %vm1887 = vcmp.lt.s32.totalorder %v1628, %v1879
      %vm1888 = vcmp.lt.s32.totalorder %v1629, %v1879
      %vm1889 = vcmp.lt.s32.totalorder %v1630, %v1879
      %vm1890 = vcmp.lt.s32.totalorder %v1631, %v1879
      %vm1891 = vcmp.lt.s32.totalorder %v1632, %v1879
      %vm1892 = vcmp.lt.s32.totalorder %v1633, %v1879
      %vm1893 = vcmp.lt.s32.totalorder %v1634, %v1879
      %vm1894 = vcmp.lt.s32.totalorder %v1635, %v1879
      %vm1895 = vcmp.lt.s32.totalorder %v1636, %v1879
      %vm1896 = vcmp.lt.s32.totalorder %v1637, %v1879
      %vm1897 = vcmp.lt.s32.totalorder %v1638, %v1879
      %vm1898 = vcmp.lt.s32.totalorder %v1639, %v1879
      %vm1899 = vcmp.lt.s32.totalorder %v1640, %v1879
      %vm1900 = vcmp.lt.s32.totalorder %v1641, %v1879
      %vm1901 = vcmp.lt.s32.totalorder %v1642, %v1879
      %vm1902 = vcmp.lt.s32.totalorder %v1643, %v1879
      %vm1903 = vcmp.lt.s32.totalorder %v1644, %v1879
      %vm1904 = vcmp.lt.s32.totalorder %v1645, %v1879
      %vm1905 = vcmp.lt.s32.totalorder %v1646, %v1879
      %vm1906 = vcmp.lt.s32.totalorder %v1647, %v1879
      %vm1907 = vcmp.lt.s32.totalorder %v1648, %v1879
      %vm1908 = vcmp.lt.s32.totalorder %v1649, %v1879
      %vm1909 = vcmp.lt.s32.totalorder %v1650, %v1879
      %vm1910 = vcmp.lt.s32.totalorder %v1651, %v1879
      %vm1911 = vcmp.lt.s32.totalorder %v1652, %v1879
      %vm1912 = vcmp.lt.s32.totalorder %v1653, %v1879
      %vm1913 = vcmp.lt.s32.totalorder %v1654, %v1879
      %vm1914 = vcmp.lt.s32.totalorder %v1655, %v1879
      %vm1915 = vcmp.lt.s32.totalorder %v1656, %v1879
      %vm1916 = vcmp.lt.s32.totalorder %v1657, %v1879
      %vm1917 = vcmp.lt.s32.totalorder %v1658, %v1879
      %vm1918 = vcmp.lt.s32.totalorder %v1659, %v1879
      %vm1919 = vcmp.lt.s32.totalorder %v1660, %v1879
      %vm1920 = vcmp.lt.s32.totalorder %v1661, %v1879
      %vm1921 = vcmp.lt.s32.totalorder %v1662, %v1879
      %vm1922 = vcmp.lt.s32.totalorder %v1663, %v1879
      %vm1923 = vcmp.lt.s32.totalorder %v1664, %v1879
      %vm1924 = vcmp.lt.s32.totalorder %v1665, %v1879
      %vm1925 = vcmp.lt.s32.totalorder %v1666, %v1879
      %vm1926 = vcmp.lt.s32.totalorder %v1667, %v1879
      %vm1927 = vcmp.lt.s32.totalorder %v1668, %v1879
      %vm1928 = vcmp.lt.s32.totalorder %v1669, %v1879
      %vm1929 = vcmp.lt.s32.totalorder %v1670, %v1879
      %vm1930 = vcmp.lt.s32.totalorder %v1671, %v1879
      %vm1931 = vcmp.lt.s32.totalorder %v1672, %v1879
      %vm1932 = vcmp.lt.s32.totalorder %v1673, %v1879
      %vm1933 = vcmp.lt.s32.totalorder %v1674, %v1879
      %vm1934 = vcmp.lt.s32.totalorder %v1675, %v1879
      %vm1935 = vcmp.lt.s32.totalorder %v1676, %v1879
      %vm1936 = vcmp.lt.s32.totalorder %v1677, %v1879
      %vm1937 = vcmp.lt.s32.totalorder %v1678, %v1879
      %vm1938 = vcmp.lt.s32.totalorder %v1679, %v1879
      %vm1939 = vcmp.lt.s32.totalorder %v1680, %v1879
      %vm1940 = vcmp.lt.s32.totalorder %v1681, %v1879
      %vm1941 = vcmp.lt.s32.totalorder %v1682, %v1879
      %vm1942 = vcmp.lt.s32.totalorder %v1683, %v1879
      %vm1943 = vcmp.lt.s32.totalorder %v1684, %v1879
      %vm1944 = vcmp.lt.s32.totalorder %v1685, %v1879
      %vm1945 = vcmp.lt.s32.totalorder %v1686, %v1879
      %vm1946 = vcmp.lt.s32.totalorder %v1687, %v1879
      %vm1947 = vcmp.lt.s32.totalorder %v1688, %v1879
      %vm1948 = vcmp.lt.s32.totalorder %v1689, %v1879
      %vm1949 = vcmp.lt.s32.totalorder %v1690, %v1879
      %vm1950 = vcmp.lt.s32.totalorder %v1691, %v1879
      %vm1951 = vcmp.lt.s32.totalorder %v1692, %v1879
      %vm1952 = vcmp.lt.s32.totalorder %v1693, %v1879
      %vm1953 = vcmp.lt.s32.totalorder %v1694, %v1879
      %vm1954 = vcmp.lt.s32.totalorder %v1695, %v1879
      %vm1955 = vcmp.lt.s32.totalorder %v1696, %v1879
      %vm1956 = vcmp.lt.s32.totalorder %v1697, %v1879
      %vm1957 = vcmp.lt.s32.totalorder %v1698, %v1879
      %vm1958 = vcmp.lt.s32.totalorder %v1699, %v1879
      %vm1959 = vcmp.lt.s32.totalorder %v1700, %v1879
      %vm1960 = vcmp.lt.s32.totalorder %v1701, %v1879
      %vm1961 = vcmp.lt.s32.totalorder %v1702, %v1879
      %vm1962 = vcmp.lt.s32.totalorder %v1703, %v1879
      %vm1963 = vcmp.lt.s32.totalorder %v1704, %v1879
      %vm1964 = vcmp.lt.s32.totalorder %v1705, %v1879
      %vm1965 = vcmp.lt.s32.totalorder %v1706, %v1879
      %vm1966 = vcmp.lt.s32.totalorder %v1707, %v1879
      %vm1967 = vcmp.lt.s32.totalorder %v1708, %v1879
      %vm1968 = vcmp.lt.s32.totalorder %v1709, %v1879
      %vm1969 = vcmp.lt.s32.totalorder %v1710, %v1879
      %vm1970 = vcmp.lt.s32.totalorder %v1711, %v1879
      %vm1971 = vcmp.lt.s32.totalorder %v1712, %v1879
      %vm1972 = vcmp.lt.s32.totalorder %v1713, %v1879
      %vm1973 = vcmp.lt.s32.totalorder %v1714, %v1879
      %vm1974 = vcmp.lt.s32.totalorder %v1715, %v1879
      %vm1975 = vcmp.lt.s32.totalorder %v1716, %v1879
      %vm1976 = vcmp.lt.s32.totalorder %v1717, %v1879
      %vm1977 = vcmp.lt.s32.totalorder %v1718, %v1879
      %vm1978 = vcmp.lt.s32.totalorder %v1719, %v1879
      %vm1979 = vcmp.lt.s32.totalorder %v1720, %v1879
      %vm1980 = vcmp.lt.s32.totalorder %v1721, %v1879
      %vm1981 = vcmp.lt.s32.totalorder %v1722, %v1879
      %vm1982 = vcmp.lt.s32.totalorder %v1723, %v1879
      %vm1983 = vcmp.lt.s32.totalorder %v1724, %v1879
      %vm1984 = vcmp.lt.s32.totalorder %v1725, %v1879
      %vm1985 = vcmp.lt.s32.totalorder %v1726, %v1879
      %vm1986 = vcmp.lt.s32.totalorder %v1727, %v1879
      %vm1987 = vcmp.lt.s32.totalorder %v1728, %v1879
      %vm1988 = vcmp.lt.s32.totalorder %v1729, %v1879
      %vm1989 = vcmp.lt.s32.totalorder %v1730, %v1879
      %vm1990 = vcmp.lt.s32.totalorder %v1731, %v1879
      %vm1991 = vcmp.lt.s32.totalorder %v1732, %v1879
      %vm1992 = vcmp.lt.s32.totalorder %v1733, %v1879
      %vm1993 = vcmp.lt.s32.totalorder %v1734, %v1879
      %vm1994 = vcmp.lt.s32.totalorder %v1735, %v1879
      %vm1995 = vcmp.lt.s32.totalorder %v1736, %v1879
      %vm1996 = vcmp.lt.s32.totalorder %v1737, %v1879
      %vm1997 = vcmp.lt.s32.totalorder %v1738, %v1879
      %vm1998 = vcmp.lt.s32.totalorder %v1739, %v1879
      %vm1999 = vcmp.lt.s32.totalorder %v1740, %v1879
      %vm2000 = vcmp.lt.s32.totalorder %v1741, %v1879
      %vm2001 = vcmp.lt.s32.totalorder %v1742, %v1879
      %vm2002 = vcmp.lt.s32.totalorder %v1743, %v1879
      %vm2003 = vcmp.lt.s32.totalorder %v1744, %v1879
      %vm2004 = vcmp.lt.s32.totalorder %v1745, %v1879
      %vm2005 = vcmp.lt.s32.totalorder %v1746, %v1879
      %vm2006 = vcmp.lt.s32.totalorder %v1747, %v1879
      %vm2007 = vcmp.lt.s32.totalorder %v1748, %v1879
      %vm2008 = vcmp.lt.s32.totalorder %v1749, %v1879
      %vm2009 = vcmp.lt.s32.totalorder %v1750, %v1879
      %vm2010 = vcmp.lt.s32.totalorder %v1751, %v1879
      %vm2011 = vcmp.lt.s32.totalorder %v1752, %v1879
      %vm2012 = vcmp.lt.s32.totalorder %v1753, %v1879
      %vm2013 = vcmp.lt.s32.totalorder %v1754, %v1879
      %vm2014 = vcmp.lt.s32.totalorder %v1755, %v1879
      %vm2015 = vcmp.lt.s32.totalorder %v1756, %v1879
      %vm2016 = vcmp.lt.s32.totalorder %v1757, %v1879
      %vm2017 = vcmp.lt.s32.totalorder %v1758, %v1879
      %vm2018 = vcmp.lt.s32.totalorder %v1759, %v1879
      %vm2019 = vcmp.lt.s32.totalorder %v1760, %v1879
      %vm2020 = vcmp.lt.s32.totalorder %v1761, %v1879
      %vm2021 = vcmp.lt.s32.totalorder %v1762, %v1879
      %vm2022 = vcmp.lt.s32.totalorder %v1763, %v1879
      %vm2023 = vcmp.lt.s32.totalorder %v1764, %v1879
      %vm2024 = vcmp.lt.s32.totalorder %v1765, %v1879
      %vm2025 = vcmp.lt.s32.totalorder %v1766, %v1879
      %vm2026 = vcmp.lt.s32.totalorder %v1767, %v1879
      %vm2027 = vcmp.lt.s32.totalorder %v1768, %v1879
      %vm2028 = vcmp.lt.s32.totalorder %v1769, %v1879
      %vm2029 = vcmp.lt.s32.totalorder %v1770, %v1879
      %vm2030 = vcmp.lt.s32.totalorder %v1771, %v1879
      %vm2031 = vcmp.lt.s32.totalorder %v1772, %v1879
      %vm2032 = vcmp.lt.s32.totalorder %v1773, %v1879
      %vm2033 = vcmp.lt.s32.totalorder %v1774, %v1879
      %vm2034 = vcmp.lt.s32.totalorder %v1775, %v1879
      %vm2035 = vcmp.lt.s32.totalorder %v1776, %v1879
      %vm2036 = vcmp.lt.s32.totalorder %v1777, %v1879
      %vm2037 = vcmp.lt.s32.totalorder %v1778, %v1879
      %vm2038 = vcmp.lt.s32.totalorder %v1779, %v1879
      %vm2039 = vcmp.lt.s32.totalorder %v1780, %v1879
      %vm2040 = vcmp.lt.s32.totalorder %v1781, %v1879
      %vm2041 = vcmp.lt.s32.totalorder %v1782, %v1879
      %vm2042 = vcmp.lt.s32.totalorder %v1783, %v1879
      %vm2043 = vcmp.lt.s32.totalorder %v1784, %v1879
      %vm2044 = vcmp.lt.s32.totalorder %v1785, %v1879
      %vm2045 = vcmp.lt.s32.totalorder %v1786, %v1879
      %vm2046 = vcmp.lt.s32.totalorder %v1787, %v1879
      %vm2047 = vcmp.lt.s32.totalorder %v1788, %v1879
      %vm2048 = vcmp.lt.s32.totalorder %v1789, %v1879
      %vm2049 = vcmp.lt.s32.totalorder %v1790, %v1879
      %vm2050 = vcmp.lt.s32.totalorder %v1791, %v1879
      %vm2051 = vcmp.lt.s32.totalorder %v1792, %v1879
      %vm2052 = vcmp.lt.s32.totalorder %v1793, %v1879
      %vm2053 = vcmp.lt.s32.totalorder %v1794, %v1879
      %vm2054 = vcmp.lt.s32.totalorder %v1795, %v1879
      %vm2055 = vcmp.lt.s32.totalorder %v1796, %v1879
      %vm2056 = vcmp.lt.s32.totalorder %v1797, %v1879
      %vm2057 = vcmp.lt.s32.totalorder %v1798, %v1879
      %vm2058 = vcmp.lt.s32.totalorder %v1799, %v1879
      %vm2059 = vcmp.lt.s32.totalorder %v1800, %v1879
      %vm2060 = vcmp.lt.s32.totalorder %v1801, %v1879
      %vm2061 = vcmp.lt.s32.totalorder %v1802, %v1879
      %vm2062 = vcmp.lt.s32.totalorder %v1803, %v1879
      %vm2063 = vcmp.lt.s32.totalorder %v1804, %v1879
      %vm2064 = vcmp.lt.s32.totalorder %v1805, %v1879
      %vm2065 = vcmp.lt.s32.totalorder %v1806, %v1879
      %vm2066 = vcmp.lt.s32.totalorder %v1807, %v1879
      %vm2067 = vcmp.lt.s32.totalorder %v1808, %v1879
      %vm2068 = vcmp.lt.s32.totalorder %v1809, %v1879
      %vm2069 = vcmp.lt.s32.totalorder %v1810, %v1879
      %vm2070 = vcmp.lt.s32.totalorder %v1811, %v1879
      %vm2071 = vcmp.lt.s32.totalorder %v1812, %v1879
      %vm2072 = vcmp.lt.s32.totalorder %v1813, %v1879
      %vm2073 = vcmp.lt.s32.totalorder %v1814, %v1879
      %vm2074 = vcmp.lt.s32.totalorder %v1815, %v1879
      %vm2075 = vcmp.lt.s32.totalorder %v1816, %v1879
      %vm2076 = vcmp.lt.s32.totalorder %v1817, %v1879
      %vm2077 = vcmp.lt.s32.totalorder %v1818, %v1879
      %vm2078 = vcmp.lt.s32.totalorder %v1819, %v1879
      %vm2079 = vcmp.lt.s32.totalorder %v1820, %v1879
      %vm2080 = vcmp.lt.s32.totalorder %v1821, %v1879
      %vm2081 = vcmp.lt.s32.totalorder %v1822, %v1879
      %vm2082 = vcmp.lt.s32.totalorder %v1823, %v1879
      %vm2083 = vcmp.lt.s32.totalorder %v1824, %v1879
      %vm2084 = vcmp.lt.s32.totalorder %v1825, %v1879
      %vm2085 = vcmp.lt.s32.totalorder %v1826, %v1879
      %vm2086 = vcmp.lt.s32.totalorder %v1827, %v1879
      %vm2087 = vcmp.lt.s32.totalorder %v1828, %v1879
      %vm2088 = vcmp.lt.s32.totalorder %v1829, %v1879
      %vm2089 = vcmp.lt.s32.totalorder %v1830, %v1879
      %vm2090 = vcmp.lt.s32.totalorder %v1831, %v1879
      %vm2091 = vcmp.lt.s32.totalorder %v1832, %v1879
      %vm2092 = vcmp.lt.s32.totalorder %v1833, %v1879
      %vm2093 = vcmp.lt.s32.totalorder %v1834, %v1879
      %vm2094 = vcmp.lt.s32.totalorder %v1835, %v1879
      %vm2095 = vcmp.lt.s32.totalorder %v1836, %v1879
      %vm2096 = vcmp.lt.s32.totalorder %v1837, %v1879
      %vm2097 = vcmp.lt.s32.totalorder %v1838, %v1879
      %vm2098 = vcmp.lt.s32.totalorder %v1839, %v1879
      %vm2099 = vcmp.lt.s32.totalorder %v1840, %v1879
      %vm2100 = vcmp.lt.s32.totalorder %v1841, %v1879
      %vm2101 = vcmp.lt.s32.totalorder %v1842, %v1879
      %vm2102 = vcmp.lt.s32.totalorder %v1843, %v1879
      %vm2103 = vcmp.lt.s32.totalorder %v1844, %v1879
      %vm2104 = vcmp.lt.s32.totalorder %v1845, %v1879
      %vm2105 = vcmp.lt.s32.totalorder %v1846, %v1879
      %vm2106 = vcmp.lt.s32.totalorder %v1847, %v1879
      %vm2107 = vcmp.lt.s32.totalorder %v1848, %v1879
      %vm2108 = vcmp.lt.s32.totalorder %v1849, %v1879
      %vm2109 = vcmp.lt.s32.totalorder %v1850, %v1879
      %vm2110 = vcmp.lt.s32.totalorder %v1851, %v1879
      %vm2111 = vcmp.lt.s32.totalorder %v1852, %v1879
      %vm2112 = vcmp.lt.s32.totalorder %v1853, %v1879
      %vm2113 = vcmp.lt.s32.totalorder %v1854, %v1879
      %vm2114 = vcmp.lt.s32.totalorder %v1855, %v1879
      %vm2115 = vcmp.lt.s32.totalorder %v1856, %v1879
      %vm2116 = vcmp.lt.s32.totalorder %v1857, %v1879
      %vm2117 = vcmp.lt.s32.totalorder %v1858, %v1879
      %vm2118 = vcmp.lt.s32.totalorder %v1859, %v1879
      %vm2119 = vcmp.lt.s32.totalorder %v1860, %v1879
      %vm2120 = vcmp.lt.s32.totalorder %v1861, %v1879
      %vm2121 = vcmp.lt.s32.totalorder %v1862, %v1879
      %vm2122 = vcmp.lt.s32.totalorder %v1863, %v1879
      %vm2123 = vcmp.lt.s32.totalorder %v1864, %v1879
      %vm2124 = vcmp.lt.s32.totalorder %v1865, %v1879
      %vm2125 = vcmp.lt.s32.totalorder %v1866, %v1879
      %vm2126 = vcmp.lt.s32.totalorder %v1867, %v1879
      %vm2127 = vcmp.lt.s32.totalorder %v1868, %v1879
      %vm2128 = vcmp.lt.s32.totalorder %v1869, %v1879
      %vm2129 = vcmp.lt.s32.totalorder %v1870, %v1879
      %vm2130 = vcmp.lt.s32.totalorder %v1871, %v1879
      %vm2131 = vcmp.lt.s32.totalorder %v1872, %v1879
      %vm2132 = vcmp.lt.s32.totalorder %v1873, %v1879
      %vm2133 = vcmp.lt.s32.totalorder %v1874, %v1879
      %vm2134 = vcmp.lt.s32.totalorder %v1875, %v1879
      %vm2135 = vcmp.lt.s32.totalorder %v1876, %v1879
      %v2136 = vsel %vm1880, %v838, 0.0
      %v2137 = vsel %vm1881, %v839, 0.0
      %v2138 = vsel %vm1882, %v840, 0.0
      %v2139 = vsel %vm1883, %v841, 0.0
      %v2140 = vsel %vm1884, %v842, 0.0
      %v2141 = vsel %vm1885, %v843, 0.0
      %v2142 = vsel %vm1886, %v844, 0.0
      %v2143 = vsel %vm1887, %v845, 0.0
      %v2144 = vsel %vm1888, %v846, 0.0
      %v2145 = vsel %vm1889, %v847, 0.0
      %v2146 = vsel %vm1890, %v848, 0.0
      %v2147 = vsel %vm1891, %v849, 0.0
      %v2148 = vsel %vm1892, %v850, 0.0
      %v2149 = vsel %vm1893, %v851, 0.0
      %v2150 = vsel %vm1894, %v852, 0.0
      %v2151 = vsel %vm1895, %v853, 0.0
      %v2152 = vsel %vm1896, %v854, 0.0
      %v2153 = vsel %vm1897, %v855, 0.0
      %v2154 = vsel %vm1898, %v856, 0.0
      %v2155 = vsel %vm1899, %v857, 0.0
      %v2156 = vsel %vm1900, %v858, 0.0
      %v2157 = vsel %vm1901, %v859, 0.0
      %v2158 = vsel %vm1902, %v860, 0.0
      %v2159 = vsel %vm1903, %v861, 0.0
      %v2160 = vsel %vm1904, %v862, 0.0
      %v2161 = vsel %vm1905, %v863, 0.0
      %v2162 = vsel %vm1906, %v864, 0.0
      %v2163 = vsel %vm1907, %v865, 0.0
      %v2164 = vsel %vm1908, %v866, 0.0
      %v2165 = vsel %vm1909, %v867, 0.0
      %v2166 = vsel %vm1910, %v868, 0.0
      %v2167 = vsel %vm1911, %v869, 0.0
      %v2168 = vsel %vm1912, %v870, 0.0
      %v2169 = vsel %vm1913, %v871, 0.0
      %v2170 = vsel %vm1914, %v872, 0.0
      %v2171 = vsel %vm1915, %v873, 0.0
      %v2172 = vsel %vm1916, %v874, 0.0
      %v2173 = vsel %vm1917, %v875, 0.0
      %v2174 = vsel %vm1918, %v876, 0.0
      %v2175 = vsel %vm1919, %v877, 0.0
      %v2176 = vsel %vm1920, %v878, 0.0
      %v2177 = vsel %vm1921, %v879, 0.0
      %v2178 = vsel %vm1922, %v880, 0.0
      %v2179 = vsel %vm1923, %v881, 0.0
      %v2180 = vsel %vm1924, %v882, 0.0
      %v2181 = vsel %vm1925, %v883, 0.0
      %v2182 = vsel %vm1926, %v884, 0.0
      %v2183 = vsel %vm1927, %v885, 0.0
      %v2184 = vsel %vm1928, %v886, 0.0
      %v2185 = vsel %vm1929, %v887, 0.0
      %v2186 = vsel %vm1930, %v888, 0.0
      %v2187 = vsel %vm1931, %v889, 0.0
      %v2188 = vsel %vm1932, %v890, 0.0
      %v2189 = vsel %vm1933, %v891, 0.0
      %v2190 = vsel %vm1934, %v892, 0.0
      %v2191 = vsel %vm1935, %v893, 0.0
      %v2192 = vsel %vm1936, %v894, 0.0
      %v2193 = vsel %vm1937, %v895, 0.0
      %v2194 = vsel %vm1938, %v896, 0.0
      %v2195 = vsel %vm1939, %v897, 0.0
      %v2196 = vsel %vm1940, %v898, 0.0
      %v2197 = vsel %vm1941, %v899, 0.0
      %v2198 = vsel %vm1942, %v900, 0.0
      %v2199 = vsel %vm1943, %v901, 0.0
      %v2200 = vsel %vm1944, %v902, 0.0
      %v2201 = vsel %vm1945, %v903, 0.0
      %v2202 = vsel %vm1946, %v904, 0.0
      %v2203 = vsel %vm1947, %v905, 0.0
      %v2204 = vsel %vm1948, %v906, 0.0
      %v2205 = vsel %vm1949, %v907, 0.0
      %v2206 = vsel %vm1950, %v908, 0.0
      %v2207 = vsel %vm1951, %v909, 0.0
      %v2208 = vsel %vm1952, %v910, 0.0
      %v2209 = vsel %vm1953, %v911, 0.0
      %v2210 = vsel %vm1954, %v912, 0.0
      %v2211 = vsel %vm1955, %v913, 0.0
      %v2212 = vsel %vm1956, %v914, 0.0
      %v2213 = vsel %vm1957, %v915, 0.0
      %v2214 = vsel %vm1958, %v916, 0.0
      %v2215 = vsel %vm1959, %v917, 0.0
      %v2216 = vsel %vm1960, %v918, 0.0
      %v2217 = vsel %vm1961, %v919, 0.0
      %v2218 = vsel %vm1962, %v920, 0.0
      %v2219 = vsel %vm1963, %v921, 0.0
      %v2220 = vsel %vm1964, %v922, 0.0
      %v2221 = vsel %vm1965, %v923, 0.0
      %v2222 = vsel %vm1966, %v924, 0.0
      %v2223 = vsel %vm1967, %v925, 0.0
      %v2224 = vsel %vm1968, %v926, 0.0
      %v2225 = vsel %vm1969, %v927, 0.0
      %v2226 = vsel %vm1970, %v928, 0.0
      %v2227 = vsel %vm1971, %v929, 0.0
      %v2228 = vsel %vm1972, %v930, 0.0
      %v2229 = vsel %vm1973, %v931, 0.0
      %v2230 = vsel %vm1974, %v932, 0.0
      %v2231 = vsel %vm1975, %v933, 0.0
      %v2232 = vsel %vm1976, %v934, 0.0
      %v2233 = vsel %vm1977, %v935, 0.0
      %v2234 = vsel %vm1978, %v936, 0.0
      %v2235 = vsel %vm1979, %v937, 0.0
      %v2236 = vsel %vm1980, %v938, 0.0
      %v2237 = vsel %vm1981, %v939, 0.0
      %v2238 = vsel %vm1982, %v940, 0.0
      %v2239 = vsel %vm1983, %v941, 0.0
      %v2240 = vsel %vm1984, %v942, 0.0
      %v2241 = vsel %vm1985, %v943, 0.0
      %v2242 = vsel %vm1986, %v944, 0.0
      %v2243 = vsel %vm1987, %v945, 0.0
      %v2244 = vsel %vm1988, %v946, 0.0
      %v2245 = vsel %vm1989, %v947, 0.0
      %v2246 = vsel %vm1990, %v948, 0.0
      %v2247 = vsel %vm1991, %v949, 0.0
      %v2248 = vsel %vm1992, %v950, 0.0
      %v2249 = vsel %vm1993, %v951, 0.0
      %v2250 = vsel %vm1994, %v952, 0.0
      %v2251 = vsel %vm1995, %v953, 0.0
      %v2252 = vsel %vm1996, %v954, 0.0
      %v2253 = vsel %vm1997, %v955, 0.0
      %v2254 = vsel %vm1998, %v956, 0.0
      %v2255 = vsel %vm1999, %v957, 0.0
      %v2256 = vsel %vm2000, %v958, 0.0
      %v2257 = vsel %vm2001, %v959, 0.0
      %v2258 = vsel %vm2002, %v960, 0.0
      %v2259 = vsel %vm2003, %v961, 0.0
      %v2260 = vsel %vm2004, %v962, 0.0
      %v2261 = vsel %vm2005, %v963, 0.0
      %v2262 = vsel %vm2006, %v964, 0.0
      %v2263 = vsel %vm2007, %v965, 0.0
      %v2264 = vsel %vm2008, %v966, 0.0
      %v2265 = vsel %vm2009, %v967, 0.0
      %v2266 = vsel %vm2010, %v968, 0.0
      %v2267 = vsel %vm2011, %v969, 0.0
      %v2268 = vsel %vm2012, %v970, 0.0
      %v2269 = vsel %vm2013, %v971, 0.0
      %v2270 = vsel %vm2014, %v972, 0.0
      %v2271 = vsel %vm2015, %v973, 0.0
      %v2272 = vsel %vm2016, %v974, 0.0
      %v2273 = vsel %vm2017, %v975, 0.0
      %v2274 = vsel %vm2018, %v976, 0.0
      %v2275 = vsel %vm2019, %v977, 0.0
      %v2276 = vsel %vm2020, %v978, 0.0
      %v2277 = vsel %vm2021, %v979, 0.0
      %v2278 = vsel %vm2022, %v980, 0.0
      %v2279 = vsel %vm2023, %v981, 0.0
      %v2280 = vsel %vm2024, %v982, 0.0
      %v2281 = vsel %vm2025, %v983, 0.0
      %v2282 = vsel %vm2026, %v984, 0.0
      %v2283 = vsel %vm2027, %v985, 0.0
      %v2284 = vsel %vm2028, %v986, 0.0
      %v2285 = vsel %vm2029, %v987, 0.0
      %v2286 = vsel %vm2030, %v988, 0.0
      %v2287 = vsel %vm2031, %v989, 0.0
      %v2288 = vsel %vm2032, %v990, 0.0
      %v2289 = vsel %vm2033, %v991, 0.0
      %v2290 = vsel %vm2034, %v992, 0.0
      %v2291 = vsel %vm2035, %v993, 0.0
      %v2292 = vsel %vm2036, %v994, 0.0
      %v2293 = vsel %vm2037, %v995, 0.0
      %v2294 = vsel %vm2038, %v996, 0.0
      %v2295 = vsel %vm2039, %v997, 0.0
      %v2296 = vsel %vm2040, %v998, 0.0
      %v2297 = vsel %vm2041, %v999, 0.0
      %v2298 = vsel %vm2042, %v1000, 0.0
      %v2299 = vsel %vm2043, %v1001, 0.0
      %v2300 = vsel %vm2044, %v1002, 0.0
      %v2301 = vsel %vm2045, %v1003, 0.0
      %v2302 = vsel %vm2046, %v1004, 0.0
      %v2303 = vsel %vm2047, %v1005, 0.0
      %v2304 = vsel %vm2048, %v1006, 0.0
      %v2305 = vsel %vm2049, %v1007, 0.0
      %v2306 = vsel %vm2050, %v1008, 0.0
      %v2307 = vsel %vm2051, %v1009, 0.0
      %v2308 = vsel %vm2052, %v1010, 0.0
      %v2309 = vsel %vm2053, %v1011, 0.0
      %v2310 = vsel %vm2054, %v1012, 0.0
      %v2311 = vsel %vm2055, %v1013, 0.0
      %v2312 = vsel %vm2056, %v1014, 0.0
      %v2313 = vsel %vm2057, %v1015, 0.0
      %v2314 = vsel %vm2058, %v1016, 0.0
      %v2315 = vsel %vm2059, %v1017, 0.0
      %v2316 = vsel %vm2060, %v1018, 0.0
      %v2317 = vsel %vm2061, %v1019, 0.0
      %v2318 = vsel %vm2062, %v1020, 0.0
      %v2319 = vsel %vm2063, %v1021, 0.0
      %v2320 = vsel %vm2064, %v1022, 0.0
      %v2321 = vsel %vm2065, %v1023, 0.0
      %v2322 = vsel %vm2066, %v1024, 0.0
      %v2323 = vsel %vm2067, %v1025, 0.0
      %v2324 = vsel %vm2068, %v1026, 0.0
      %v2325 = vsel %vm2069, %v1027, 0.0
      %v2326 = vsel %vm2070, %v1028, 0.0
      %v2327 = vsel %vm2071, %v1029, 0.0
      %v2328 = vsel %vm2072, %v1030, 0.0
      %v2329 = vsel %vm2073, %v1031, 0.0
      %v2330 = vsel %vm2074, %v1032, 0.0
      %v2331 = vsel %vm2075, %v1033, 0.0
      %v2332 = vsel %vm2076, %v1034, 0.0
      %v2333 = vsel %vm2077, %v1035, 0.0
      %v2334 = vsel %vm2078, %v1036, 0.0
      %v2335 = vsel %vm2079, %v1037, 0.0
      %v2336 = vsel %vm2080, %v1038, 0.0
      %v2337 = vsel %vm2081, %v1039, 0.0
      %v2338 = vsel %vm2082, %v1040, 0.0
      %v2339 = vsel %vm2083, %v1041, 0.0
      %v2340 = vsel %vm2084, %v1042, 0.0
      %v2341 = vsel %vm2085, %v1043, 0.0
      %v2342 = vsel %vm2086, %v1044, 0.0
      %v2343 = vsel %vm2087, %v1045, 0.0
      %v2344 = vsel %vm2088, %v1046, 0.0
      %v2345 = vsel %vm2089, %v1047, 0.0
      %v2346 = vsel %vm2090, %v1048, 0.0
      %v2347 = vsel %vm2091, %v1049, 0.0
      %v2348 = vsel %vm2092, %v1050, 0.0
      %v2349 = vsel %vm2093, %v1051, 0.0
      %v2350 = vsel %vm2094, %v1052, 0.0
      %v2351 = vsel %vm2095, %v1053, 0.0
      %v2352 = vsel %vm2096, %v1054, 0.0
      %v2353 = vsel %vm2097, %v1055, 0.0
      %v2354 = vsel %vm2098, %v1056, 0.0
      %v2355 = vsel %vm2099, %v1057, 0.0
      %v2356 = vsel %vm2100, %v1058, 0.0
      %v2357 = vsel %vm2101, %v1059, 0.0
      %v2358 = vsel %vm2102, %v1060, 0.0
      %v2359 = vsel %vm2103, %v1061, 0.0
      %v2360 = vsel %vm2104, %v1062, 0.0
      %v2361 = vsel %vm2105, %v1063, 0.0
      %v2362 = vsel %vm2106, %v1064, 0.0
      %v2363 = vsel %vm2107, %v1065, 0.0
      %v2364 = vsel %vm2108, %v1066, 0.0
      %v2365 = vsel %vm2109, %v1067, 0.0
      %v2366 = vsel %vm2110, %v1068, 0.0
      %v2367 = vsel %vm2111, %v1069, 0.0
      %v2368 = vsel %vm2112, %v1070, 0.0
      %v2369 = vsel %vm2113, %v1071, 0.0
      %v2370 = vsel %vm2114, %v1072, 0.0
      %v2371 = vsel %vm2115, %v1073, 0.0
      %v2372 = vsel %vm2116, %v1074, 0.0
      %v2373 = vsel %vm2117, %v1075, 0.0
      %v2374 = vsel %vm2118, %v1076, 0.0
      %v2375 = vsel %vm2119, %v1077, 0.0
      %v2376 = vsel %vm2120, %v1078, 0.0
      %v2377 = vsel %vm2121, %v1079, 0.0
      %v2378 = vsel %vm2122, %v1080, 0.0
      %v2379 = vsel %vm2123, %v1081, 0.0
      %v2380 = vsel %vm2124, %v1082, 0.0
      %v2381 = vsel %vm2125, %v1083, 0.0
      %v2382 = vsel %vm2126, %v1084, 0.0
      %v2383 = vsel %vm2127, %v1085, 0.0
      %v2384 = vsel %vm2128, %v1086, 0.0
      %v2385 = vsel %vm2129, %v1087, 0.0
      %v2386 = vsel %vm2130, %v1088, 0.0
      %v2387 = vsel %vm2131, %v1089, 0.0
      %v2388 = vsel %vm2132, %v1090, 0.0
      %v2389 = vsel %vm2133, %v1091, 0.0
      %v2390 = vsel %vm2134, %v1092, 0.0
      %v2391 = vsel %vm2135, %v1093, 0.0
      %v2392 = vld [vmem:[#allocation2] sm:$0xff]
      %v2393 = vadd.f32 %v2136, %v2137
      %v2394 = vadd.f32 %v2393, %v2138
      %v2395 = vadd.f32 %v2394, %v2139
      %v2396 = vadd.f32 %v2395, %v2140
      %v2397 = vadd.f32 %v2396, %v2141
      %v2398 = vadd.f32 %v2397, %v2142
      %v2399 = vadd.f32 %v2398, %v2143
      %v2400 = vadd.f32 %v2399, %v2144
      %v2401 = vadd.f32 %v2400, %v2145
      %v2402 = vadd.f32 %v2401, %v2146
      %v2403 = vadd.f32 %v2402, %v2147
      %v2404 = vadd.f32 %v2403, %v2148
      %v2405 = vadd.f32 %v2404, %v2149
      %v2406 = vadd.f32 %v2405, %v2150
      %v2407 = vadd.f32 %v2406, %v2151
      %v2408 = vadd.f32 %v2407, %v2152
      %v2409 = vadd.f32 %v2408, %v2153
      %v2410 = vadd.f32 %v2409, %v2154
      %v2411 = vadd.f32 %v2410, %v2155
      %v2412 = vadd.f32 %v2411, %v2156
      %v2413 = vadd.f32 %v2412, %v2157
      %v2414 = vadd.f32 %v2413, %v2158
      %v2415 = vadd.f32 %v2414, %v2159
      %v2416 = vadd.f32 %v2415, %v2160
      %v2417 = vadd.f32 %v2416, %v2161
      %v2418 = vadd.f32 %v2417, %v2162
      %v2419 = vadd.f32 %v2418, %v2163
      %v2420 = vadd.f32 %v2419, %v2164
      %v2421 = vadd.f32 %v2420, %v2165
      %v2422 = vadd.f32 %v2421, %v2166
      %v2423 = vadd.f32 %v2422, %v2167
      %v2424 = vadd.f32 %v2423, %v2168
      %v2425 = vadd.f32 %v2424, %v2169
      %v2426 = vadd.f32 %v2425, %v2170
      %v2427 = vadd.f32 %v2426, %v2171
      %v2428 = vadd.f32 %v2427, %v2172
      %v2429 = vadd.f32 %v2428, %v2173
      %v2430 = vadd.f32 %v2429, %v2174
      %v2431 = vadd.f32 %v2430, %v2175
      %v2432 = vadd.f32 %v2431, %v2176
      %v2433 = vadd.f32 %v2432, %v2177
      %v2434 = vadd.f32 %v2433, %v2178
      %v2435 = vadd.f32 %v2434, %v2179
      %v2436 = vadd.f32 %v2435, %v2180
      %v2437 = vadd.f32 %v2436, %v2181
      %v2438 = vadd.f32 %v2437, %v2182
      %v2439 = vadd.f32 %v2438, %v2183
      %v2440 = vadd.f32 %v2439, %v2184
      %v2441 = vadd.f32 %v2440, %v2185
      %v2442 = vadd.f32 %v2441, %v2186
      %v2443 = vadd.f32 %v2442, %v2187
      %v2444 = vadd.f32 %v2443, %v2188
      %v2445 = vadd.f32 %v2444, %v2189
      %v2446 = vadd.f32 %v2445, %v2190
      %v2447 = vadd.f32 %v2446, %v2191
      %v2448 = vadd.f32 %v2447, %v2192
      %v2449 = vadd.f32 %v2448, %v2193
      %v2450 = vadd.f32 %v2449, %v2194
      %v2451 = vadd.f32 %v2450, %v2195
      %v2452 = vadd.f32 %v2451, %v2196
      %v2453 = vadd.f32 %v2452, %v2197
      %v2454 = vadd.f32 %v2453, %v2198
      %v2455 = vadd.f32 %v2454, %v2199
      %v2456 = vadd.f32 %v2455, %v2200
      %v2457 = vadd.f32 %v2456, %v2201
      %v2458 = vadd.f32 %v2457, %v2202
      %v2459 = vadd.f32 %v2458, %v2203
      %v2460 = vadd.f32 %v2459, %v2204
      %v2461 = vadd.f32 %v2460, %v2205
      %v2462 = vadd.f32 %v2461, %v2206
      %v2463 = vadd.f32 %v2462, %v2207
      %v2464 = vadd.f32 %v2463, %v2208
      %v2465 = vadd.f32 %v2464, %v2209
      %v2466 = vadd.f32 %v2465, %v2210
      %v2467 = vadd.f32 %v2466, %v2211
      %v2468 = vadd.f32 %v2467, %v2212
      %v2469 = vadd.f32 %v2468, %v2213
      %v2470 = vadd.f32 %v2469, %v2214
      %v2471 = vadd.f32 %v2470, %v2215
      %v2472 = vadd.f32 %v2471, %v2216
      %v2473 = vadd.f32 %v2472, %v2217
      %v2474 = vadd.f32 %v2473, %v2218
      %v2475 = vadd.f32 %v2474, %v2219
      %v2476 = vadd.f32 %v2475, %v2220
      %v2477 = vadd.f32 %v2476, %v2221
      %v2478 = vadd.f32 %v2477, %v2222
      %v2479 = vadd.f32 %v2478, %v2223
      %v2480 = vadd.f32 %v2479, %v2224
      %v2481 = vadd.f32 %v2480, %v2225
      %v2482 = vadd.f32 %v2481, %v2226
      %v2483 = vadd.f32 %v2482, %v2227
      %v2484 = vadd.f32 %v2483, %v2228
      %v2485 = vadd.f32 %v2484, %v2229
      %v2486 = vadd.f32 %v2485, %v2230
      %v2487 = vadd.f32 %v2486, %v2231
      %v2488 = vadd.f32 %v2487, %v2232
      %v2489 = vadd.f32 %v2488, %v2233
      %v2490 = vadd.f32 %v2489, %v2234
      %v2491 = vadd.f32 %v2490, %v2235
      %v2492 = vadd.f32 %v2491, %v2236
      %v2493 = vadd.f32 %v2492, %v2237
      %v2494 = vadd.f32 %v2493, %v2238
      %v2495 = vadd.f32 %v2494, %v2239
      %v2496 = vadd.f32 %v2495, %v2240
      %v2497 = vadd.f32 %v2496, %v2241
      %v2498 = vadd.f32 %v2497, %v2242
      %v2499 = vadd.f32 %v2498, %v2243
      %v2500 = vadd.f32 %v2499, %v2244
      %v2501 = vadd.f32 %v2500, %v2245
      %v2502 = vadd.f32 %v2501, %v2246
      %v2503 = vadd.f32 %v2502, %v2247
      %v2504 = vadd.f32 %v2503, %v2248
      %v2505 = vadd.f32 %v2504, %v2249
      %v2506 = vadd.f32 %v2505, %v2250
      %v2507 = vadd.f32 %v2506, %v2251
      %v2508 = vadd.f32 %v2507, %v2252
      %v2509 = vadd.f32 %v2508, %v2253
      %v2510 = vadd.f32 %v2509, %v2254
      %v2511 = vadd.f32 %v2510, %v2255
      %v2512 = vadd.f32 %v2511, %v2256
      %v2513 = vadd.f32 %v2512, %v2257
      %v2514 = vadd.f32 %v2513, %v2258
      %v2515 = vadd.f32 %v2514, %v2259
      %v2516 = vadd.f32 %v2515, %v2260
      %v2517 = vadd.f32 %v2516, %v2261
      %v2518 = vadd.f32 %v2517, %v2262
      %v2519 = vadd.f32 %v2518, %v2263
      %v2520 = vadd.f32 %v2519, %v2264
      %v2521 = vadd.f32 %v2520, %v2265
      %v2522 = vadd.f32 %v2521, %v2266
      %v2523 = vadd.f32 %v2522, %v2267
      %v2524 = vadd.f32 %v2523, %v2268
      %v2525 = vadd.f32 %v2524, %v2269
      %v2526 = vadd.f32 %v2525, %v2270
      %v2527 = vadd.f32 %v2526, %v2271
      %v2528 = vadd.f32 %v2527, %v2272
      %v2529 = vadd.f32 %v2528, %v2273
      %v2530 = vadd.f32 %v2529, %v2274
      %v2531 = vadd.f32 %v2530, %v2275
      %v2532 = vadd.f32 %v2531, %v2276
      %v2533 = vadd.f32 %v2532, %v2277
      %v2534 = vadd.f32 %v2533, %v2278
      %v2535 = vadd.f32 %v2534, %v2279
      %v2536 = vadd.f32 %v2535, %v2280
      %v2537 = vadd.f32 %v2536, %v2281
      %v2538 = vadd.f32 %v2537, %v2282
      %v2539 = vadd.f32 %v2538, %v2283
      %v2540 = vadd.f32 %v2539, %v2284
      %v2541 = vadd.f32 %v2540, %v2285
      %v2542 = vadd.f32 %v2541, %v2286
      %v2543 = vadd.f32 %v2542, %v2287
      %v2544 = vadd.f32 %v2543, %v2288
      %v2545 = vadd.f32 %v2544, %v2289
      %v2546 = vadd.f32 %v2545, %v2290
      %v2547 = vadd.f32 %v2546, %v2291
      %v2548 = vadd.f32 %v2547, %v2292
      %v2549 = vadd.f32 %v2548, %v2293
      %v2550 = vadd.f32 %v2549, %v2294
      %v2551 = vadd.f32 %v2550, %v2295
      %v2552 = vadd.f32 %v2551, %v2296
      %v2553 = vadd.f32 %v2552, %v2297
      %v2554 = vadd.f32 %v2553, %v2298
      %v2555 = vadd.f32 %v2554, %v2299
      %v2556 = vadd.f32 %v2555, %v2300
      %v2557 = vadd.f32 %v2556, %v2301
      %v2558 = vadd.f32 %v2557, %v2302
      %v2559 = vadd.f32 %v2558, %v2303
      %v2560 = vadd.f32 %v2559, %v2304
      %v2561 = vadd.f32 %v2560, %v2305
      %v2562 = vadd.f32 %v2561, %v2306
      %v2563 = vadd.f32 %v2562, %v2307
      %v2564 = vadd.f32 %v2563, %v2308
      %v2565 = vadd.f32 %v2564, %v2309
      %v2566 = vadd.f32 %v2565, %v2310
      %v2567 = vadd.f32 %v2566, %v2311
      %v2568 = vadd.f32 %v2567, %v2312
      %v2569 = vadd.f32 %v2568, %v2313
      %v2570 = vadd.f32 %v2569, %v2314
      %v2571 = vadd.f32 %v2570, %v2315
      %v2572 = vadd.f32 %v2571, %v2316
      %v2573 = vadd.f32 %v2572, %v2317
      %v2574 = vadd.f32 %v2573, %v2318
      %v2575 = vadd.f32 %v2574, %v2319
      %v2576 = vadd.f32 %v2575, %v2320
      %v2577 = vadd.f32 %v2576, %v2321
      %v2578 = vadd.f32 %v2577, %v2322
      %v2579 = vadd.f32 %v2578, %v2323
      %v2580 = vadd.f32 %v2579, %v2324
      %v2581 = vadd.f32 %v2580, %v2325
      %v2582 = vadd.f32 %v2581, %v2326
      %v2583 = vadd.f32 %v2582, %v2327
      %v2584 = vadd.f32 %v2583, %v2328
      %v2585 = vadd.f32 %v2584, %v2329
      %v2586 = vadd.f32 %v2585, %v2330
      %v2587 = vadd.f32 %v2586, %v2331
      %v2588 = vadd.f32 %v2587, %v2332
      %v2589 = vadd.f32 %v2588, %v2333
      %v2590 = vadd.f32 %v2589, %v2334
      %v2591 = vadd.f32 %v2590, %v2335
      %v2592 = vadd.f32 %v2591, %v2336
      %v2593 = vadd.f32 %v2592, %v2337
      %v2594 = vadd.f32 %v2593, %v2338
      %v2595 = vadd.f32 %v2594, %v2339
      %v2596 = vadd.f32 %v2595, %v2340
      %v2597 = vadd.f32 %v2596, %v2341
      %v2598 = vadd.f32 %v2597, %v2342
      %v2599 = vadd.f32 %v2598, %v2343
      %v2600 = vadd.f32 %v2599, %v2344
      %v2601 = vadd.f32 %v2600, %v2345
      %v2602 = vadd.f32 %v2601, %v2346
      %v2603 = vadd.f32 %v2602, %v2347
      %v2604 = vadd.f32 %v2603, %v2348
      %v2605 = vadd.f32 %v2604, %v2349
      %v2606 = vadd.f32 %v2605, %v2350
      %v2607 = vadd.f32 %v2606, %v2351
      %v2608 = vadd.f32 %v2607, %v2352
      %v2609 = vadd.f32 %v2608, %v2353
      %v2610 = vadd.f32 %v2609, %v2354
      %v2611 = vadd.f32 %v2610, %v2355
      %v2612 = vadd.f32 %v2611, %v2356
      %v2613 = vadd.f32 %v2612, %v2357
      %v2614 = vadd.f32 %v2613, %v2358
      %v2615 = vadd.f32 %v2614, %v2359
      %v2616 = vadd.f32 %v2615, %v2360
      %v2617 = vadd.f32 %v2616, %v2361
      %v2618 = vadd.f32 %v2617, %v2362
      %v2619 = vadd.f32 %v2618, %v2363
      %v2620 = vadd.f32 %v2619, %v2364
      %v2621 = vadd.f32 %v2620, %v2365
      %v2622 = vadd.f32 %v2621, %v2366
      %v2623 = vadd.f32 %v2622, %v2367
      %v2624 = vadd.f32 %v2623, %v2368
      %v2625 = vadd.f32 %v2624, %v2369
      %v2626 = vadd.f32 %v2625, %v2370
      %v2627 = vadd.f32 %v2626, %v2371
      %v2628 = vadd.f32 %v2627, %v2372
      %v2629 = vadd.f32 %v2628, %v2373
      %v2630 = vadd.f32 %v2629, %v2374
      %v2631 = vadd.f32 %v2630, %v2375
      %v2632 = vadd.f32 %v2631, %v2376
      %v2633 = vadd.f32 %v2632, %v2377
      %v2634 = vadd.f32 %v2633, %v2378
      %v2635 = vadd.f32 %v2634, %v2379
      %v2636 = vadd.f32 %v2635, %v2380
      %v2637 = vadd.f32 %v2636, %v2381
      %v2638 = vadd.f32 %v2637, %v2382
      %v2639 = vadd.f32 %v2638, %v2383
      %v2640 = vadd.f32 %v2639, %v2384
      %v2641 = vadd.f32 %v2640, %v2385
      %v2642 = vadd.f32 %v2641, %v2386
      %v2643 = vadd.f32 %v2642, %v2387
      %v2644 = vadd.f32 %v2643, %v2388
      %v2645 = vadd.f32 %v2644, %v2389
      %v2646 = vadd.f32 %v2645, %v2390
      %v2647 = vadd.f32 %v2646, %v2391
      %v2648 = vadd.f32 %v2392, %v2647
      %2649 = vst [vmem:[#allocation2] sm:$0xff] %v2648
    $region29: #{_mse_partial_pallas.1} parent=1 // pred_fallthru
      _
    // Predicated region
    $region30: #{_mse_partial_pallas.1} parent=1 // pred_check
      %p2650 = pneg %p65
    $region31: #{_mse_partial_pallas.1} parent=1 // pred_check_branch
      %2652 = sbr.rel (%p2650) target = $region33
    $region32: #{_mse_partial_pallas.1} parent=1 // pred_region
      %v2653 = vld [vmem:[#allocation2] sm:$0xff]
      %2654 = vst [vmem:[#allocation8] sm:$0xff] %v2653
    $region33: #{_mse_partial_pallas.1} parent=1 // pred_fallthru
      _
    // Predicated region
    $region34: #{_mse_partial_pallas.1} parent=1 // pred_check
      _
    $region35: #{_mse_partial_pallas.1} parent=1 // pred_check_branch
      %2656 = sbr.rel (0) target = $region37
    $region36: #{_mse_partial_pallas.1} parent=1 // pred_region
      %2658 = vsyncadd [#allocation5], 0
      %s2660 = sshll.u32 [#allocation8], 4
      %s2661 = int_to_ptr.vmem [resolvable:$true] %s2660
      %s2662 = sshll.u32 %s2, 4
      %s2663 = int_to_ptr.hbm [resolvable:$true] %s2662
      %2665 = dma.vmem_to_hbm [thread:$0]  %s2661, 128, %s2663, [#allocation5]
    $region37: #{_mse_partial_pallas.1} parent=1 // pred_fallthru
      _
    // Predicated region
    $region38: #{_mse_partial_pallas.1} parent=1 // pred_check
      _
    $region39: #{_mse_partial_pallas.1} parent=1 // pred_check_branch
      %2667 = sbr.rel (0) target = $region41
    $region40: #{_mse_partial_pallas.1} parent=1 // pred_region
      %2669 = dma.done [#allocation5], 128
    $region41: #{_mse_partial_pallas.1} parent=1 // pred_fallthru
      _
    %2670 = vsyncpa [#allocation4], 1
    %2671 = vsyncpa [#allocation7], 1
    %2672 = vsyncpa [#allocation5], 1

</llo_original>
